<compile_context>
chip_gen: v7x
topology: tpu7x:2x2x1
jax: 0.10.0
libtpu: 0.0.40
codegen_flags: <defaults>
</compile_context>

<pallas_src>
import functools

import jax
import jax.numpy as jnp
from jax.experimental import pallas as pl
from jax.experimental.pallas import tpu as pltpu

EPS = 1e-07
BN_EPS = 1e-05
TOTAL_COUNT = 10000.0
LEAKY_SLOPE = 0.2


def _round_up(n, m):
    return ((n + m - 1) // m) * m


def _encoder_kernel(
    x_ref,
    w1_ref, b1_ref,        # layer 1: Linear (+ folded BatchNorm)
    w2_ref, b2_ref,        # layer 2: Linear (+ folded BatchNorm)
    wh_ref, bh_ref,        # fused loc/std head, padded to W lanes
    out_ref,               # packed [tile, W]: [loc | std | l | zeros]
    *, d_out,
):
    x = x_ref[...].astype(jnp.float32)

    # library size + log-normalize ('log' path).  EUP reciprocal instead of divide.
    l = jnp.sum(x, axis=1, keepdims=True)
    inv_l = pl.reciprocal(l, approx=True)
    ptr = jnp.log1p(x * (TOTAL_COUNT * inv_l))

    # hidden layer 1: Linear+BN folded, LeakyReLU(0.2), Dropout(eval)=identity
    h = jnp.dot(ptr.astype(jnp.bfloat16), w1_ref[...],
                preferred_element_type=jnp.float32) + b1_ref[...]
    h = jnp.where(h >= 0.0, h, LEAKY_SLOPE * h)

    # hidden layer 2
    h = jnp.dot(h.astype(jnp.bfloat16), w2_ref[...],
                preferred_element_type=jnp.float32) + b2_ref[...]
    h = jnp.where(h >= 0.0, h, LEAKY_SLOPE * h)

    # fused loc/std head (single MXU pass, lane-dense result)
    y = jnp.dot(h.astype(jnp.bfloat16), wh_ref[...],
                preferred_element_type=jnp.float32) + bh_ref[...]

    rows, width = out_ref.shape
    col = jax.lax.broadcasted_iota(jnp.int32, (rows, width), 1)
    sp = jax.nn.softplus(y) + EPS
    l_b = jnp.broadcast_to(l, (rows, width))

    packed = jnp.where(col < d_out, y,                      # loc
             jnp.where(col < 2 * d_out, sp,                 # std
             jnp.where(col == 2 * d_out, l_b, 0.0)))        # l | zero pad
    out_ref[...] = packed.astype(out_ref.dtype)


def data_encoder_forward(x, params, *, tile_rows=256):
    """Fused DataEncoder forward.  x: [N, in_features] float32 counts.

    Returns (loc, std, l) with shapes [N, out], [N, out], [N, 1].
    """
    N, Fin = x.shape
    Hd = params["w1"].shape[1]
    Dout = params["wloc"].shape[1]
    assert tile_rows % 8 == 0

    # Packed output width: loc (Dout) + std (Dout) + l (1), padded to 128 lanes.
    W = max(128, _round_up(2 * Dout + 1, 128))

    # ---- host-side parameter preparation (fold BN, fuse heads, cast bf16) ----
    def fold_bn(w, b, g, be, m, v):
        scale = g * jax.lax.rsqrt(v + BN_EPS)
        return w * scale[None, :], (b - m) * scale + be

    w1, b1 = fold_bn(params["w1"], params["b1"], params["g1"], params["be1"],
                     params["m1"], params["v1"])
    w2, b2 = fold_bn(params["w2"], params["b2"], params["g2"], params["be2"],
                     params["m2"], params["v2"])

    wh = jnp.concatenate([params["wloc"], params["wstd"]], axis=1)   # [Hd, 2*Dout]
    bh = jnp.concatenate([params["bloc"], params["bstd"]], axis=0)   # [2*Dout]
    wh_pad = jnp.zeros((Hd, W), jnp.float32).at[:, : 2 * Dout].set(wh)
    bh_pad = jnp.zeros((W,), jnp.float32).at[: 2 * Dout].set(bh)

    w1b = w1.astype(jnp.bfloat16)
    w2b = w2.astype(jnp.bfloat16)
    whb = wh_pad.astype(jnp.bfloat16)
    b1r = b1.reshape(1, Hd)
    b2r = b2.reshape(1, Hd)
    bhr = bh_pad.reshape(1, W)

    # ---- pad rows so N is a multiple of tile_rows (padded rows are discarded) ----
    N_pad = _round_up(N, tile_rows)
    x_pad = jnp.pad(x, ((0, N_pad - N), (0, 0))) if N_pad != N else x
    grid = N_pad // tile_rows

    # ---- VMEM budget (per-step, double-buffered) & cost estimate ----
    bytes_x = tile_rows * Fin * 4
    bytes_out = tile_rows * W * 4
    bytes_w = (Fin * Hd + Hd * Hd + Hd * W) * 2          # bf16 weights
    bytes_b = (2 * Hd + W) * 4
    vmem_need = 2 * (bytes_x + bytes_out + bytes_w + bytes_b)
    vmem_limit = int(min(int(1.5 * vmem_need) + (2 << 20), 96 << 20))

    cost = pl.CostEstimate(
        flops=2 * N_pad * (Fin * Hd + Hd * Hd + Hd * W),
        transcendentals=N_pad * (Fin + W + 1),
        bytes_accessed=N_pad * Fin * 4 + bytes_w + bytes_b + N_pad * W * 4,
    )

    in_specs = [
        pl.BlockSpec((tile_rows, Fin), lambda i: (i, 0)),
        pl.BlockSpec((Fin, Hd), lambda i: (0, 0)),
        pl.BlockSpec((1, Hd), lambda i: (0, 0)),
        pl.BlockSpec((Hd, Hd), lambda i: (0, 0)),
        pl.BlockSpec((1, Hd), lambda i: (0, 0)),
        pl.BlockSpec((Hd, W), lambda i: (0, 0)),
        pl.BlockSpec((1, W), lambda i: (0, 0)),
    ]
    out_specs = pl.BlockSpec((tile_rows, W), lambda i: (i, 0))

    packed = pl.pallas_call(
        functools.partial(_encoder_kernel, d_out=Dout),
        out_shape=jax.ShapeDtypeStruct((N_pad, W), jnp.float32),
        grid_spec=pltpu.PrefetchScalarGridSpec(
            num_scalar_prefetch=0,
            grid=(grid,),
            in_specs=in_specs,
            out_specs=out_specs,
        ),
        compiler_params=pltpu.CompilerParams(
            dimension_semantics=("parallel",),
            vmem_limit_bytes=vmem_limit,
        ),
        cost_estimate=cost,
    )(x_pad, w1b, b1r, w2b, b2r, whb, bhr)

    packed = packed[:N]
    loc = packed[:, :Dout]
    std = packed[:, Dout: 2 * Dout]
    l = packed[:, 2 * Dout: 2 * Dout + 1]
    return loc, std, l


def init_params(key, in_features, h_dim, out_features):
    """Deterministic synthetic params (non-trivial BatchNorm stats to test folding)."""
    ks = jax.random.split(key, 16)
    return {
        "w1": 0.05 * jax.random.normal(ks[0], (in_features, h_dim), jnp.float32),
        "b1": 0.01 * jax.random.normal(ks[1], (h_dim,), jnp.float32),
        "g1": 0.5 + jax.random.uniform(ks[2], (h_dim,), jnp.float32),
        "be1": 0.1 * jax.random.normal(ks[3], (h_dim,), jnp.float32),
        "m1": 0.1 * jax.random.normal(ks[4], (h_dim,), jnp.float32),
        "v1": 0.5 + jax.random.uniform(ks[5], (h_dim,), jnp.float32),
        "w2": 0.05 * jax.random.normal(ks[6], (h_dim, h_dim), jnp.float32),
        "b2": 0.01 * jax.random.normal(ks[7], (h_dim,), jnp.float32),
        "g2": 0.5 + jax.random.uniform(ks[8], (h_dim,), jnp.float32),
        "be2": 0.1 * jax.random.normal(ks[9], (h_dim,), jnp.float32),
        "m2": 0.1 * jax.random.normal(ks[10], (h_dim,), jnp.float32),
        "v2": 0.5 + jax.random.uniform(ks[11], (h_dim,), jnp.float32),
        "wloc": 0.05 * jax.random.normal(ks[12], (h_dim, out_features), jnp.float32),
        "bloc": 0.01 * jax.random.normal(ks[13], (out_features,), jnp.float32),
        "wstd": 0.05 * jax.random.normal(ks[14], (h_dim, out_features), jnp.float32),
        "bstd": 0.01 * jax.random.normal(ks[15], (out_features,), jnp.float32),
    }


def reference_forward(x, params, matmul_dtype=jnp.float32):
    """Pure-JAX eval-mode reference.  matmul_dtype=bf16 mimics the kernel's MXU path."""
    l = jnp.sum(x, axis=1, keepdims=True)
    ptr = jnp.log1p(x * (TOTAL_COUNT / l))

    def layer(h, w, b, g, be, m, v):
        scale = g / jnp.sqrt(v + BN_EPS)
        w_f = (w * scale[None, :]).astype(matmul_dtype)
        b_f = (b - m) * scale + be
        h = jnp.dot(h.astype(matmul_dtype), w_f,
                    preferred_element_type=jnp.float32) + b_f
        return jnp.where(h >= 0, h, LEAKY_SLOPE * h)

    h = layer(ptr, params["w1"], params["b1"], params["g1"], params["be1"],
              params["m1"], params["v1"])
    h = layer(h, params["w2"], params["b2"], params["g2"], params["be2"],
              params["m2"], params["v2"])

    wh = jnp.concatenate([params["wloc"], params["wstd"]], axis=1).astype(matmul_dtype)
    bh = jnp.concatenate([params["bloc"], params["bstd"]], axis=0)
    y = jnp.dot(h.astype(matmul_dtype), wh, preferred_element_type=jnp.float32) + bh
    dout = params["wloc"].shape[1]
    loc = y[:, :dout]
    std = jax.nn.softplus(y[:, dout:]) + EPS
    return loc, std, l


if __name__ == "__main__":
    key = jax.random.PRNGKey(0)
    k_x, k_p = jax.random.split(key)

    # Small, TPU-friendly test shapes (rows get padded 200 -> 256, grid = 2 steps).
    N, in_features, h_dim, out_features = 200, 64, 128, 16

    # non-negative count-like data (single-cell counts analogue); rows never sum to 0
    x = jax.random.uniform(k_x, (N, in_features), jnp.float32,
                           minval=0.0, maxval=10.0) + 0.1
    params = init_params(k_p, in_features, h_dim, out_features)

    loc, std, l = data_encoder_forward(x, params, tile_rows=128)
    jax.block_until_ready((loc, std, l))

    # Reference matching the kernel's bf16 matmul path (tight check) ...
    loc_b, std_b, l_b = reference_forward(x, params, matmul_dtype=jnp.bfloat16)
    # ... and the full-f32 PyTorch-equivalent reference (loose sanity check).
    loc_f, std_f, l_f = reference_forward(x, params, matmul_dtype=jnp.float32)

    assert jnp.allclose(l, l_f, atol=1e-2, rtol=1e-5)
    assert jnp.allclose(loc, loc_b, atol=1e-2, rtol=1e-2)
    assert jnp.allclose(std, std_b, atol=1e-2, rtol=1e-2)
    assert jnp.allclose(loc, loc_f, atol=7e-2, rtol=7e-2)
    assert jnp.allclose(std, std_f, atol=7e-2, rtol=7e-2)

    print("KERNEL_OK")
</pallas_src>

<mosaic_0001>
module attributes {stable_mosaic.version = 11 : i64} {
  func.func @_encoder_kernel(%arg0: i32, %arg1: memref<128x64xf32, #tpu.memory_space<vmem>>, %arg2: memref<64x128xbf16, #tpu.memory_space<vmem>>, %arg3: memref<1x128xf32, #tpu.memory_space<vmem>>, %arg4: memref<128x128xbf16, #tpu.memory_space<vmem>>, %arg5: memref<1x128xf32, #tpu.memory_space<vmem>>, %arg6: memref<128x128xbf16, #tpu.memory_space<vmem>>, %arg7: memref<1x128xf32, #tpu.memory_space<vmem>>, %arg8: memref<128x128xf32, #tpu.memory_space<vmem>>) attributes {dimension_semantics = [#tpu.dimension_semantics<parallel>], iteration_bounds = array<i64: 2>, scalar_prefetch = 0 : i64, scratch_operands = 0 : i64, tpu.core_type = #tpu.core_type<tc>, window_params = [{transform_indices = @transform_0, window_bounds = array<i64: 128, 64>}, {pipeline_mode = #tpu.pipeline_mode<synchronous>, transform_indices = @transform_1, window_bounds = array<i64: 64, 128>}, {pipeline_mode = #tpu.pipeline_mode<synchronous>, transform_indices = @transform_2, window_bounds = array<i64: 1, 128>}, {pipeline_mode = #tpu.pipeline_mode<synchronous>, transform_indices = @transform_3, window_bounds = array<i64: 128, 128>}, {pipeline_mode = #tpu.pipeline_mode<synchronous>, transform_indices = @transform_4, window_bounds = array<i64: 1, 128>}, {pipeline_mode = #tpu.pipeline_mode<synchronous>, transform_indices = @transform_5, window_bounds = array<i64: 128, 128>}, {pipeline_mode = #tpu.pipeline_mode<synchronous>, transform_indices = @transform_6, window_bounds = array<i64: 1, 128>}, {transform_indices = @transform_7, window_bounds = array<i64: 128, 128>}]} {
    %c0 = arith.constant 0 : index
    %c0_0 = arith.constant 0 : index
    %0 = vector.load %arg1[%c0, %c0_0] : memref<128x64xf32, #tpu.memory_space<vmem>>, vector<128x64xf32>
    %cst = arith.constant dense<0.000000e+00> : vector<128xf32>
    %1 = vector.multi_reduction <add>, %0, %cst [1] : vector<128x64xf32> to vector<128xf32>
    %2 = vector.shape_cast %1 : vector<128xf32> to vector<128x1xf32>
    %3 = tpu.reciprocal %2 {approx = true} : vector<128x1xf32> -> vector<128x1xf32>
    %cst_1 = arith.constant 1.000000e+04 : f32
    %4 = vector.broadcast %cst_1 : f32 to vector<128x1xf32>
    %5 = arith.mulf %4, %3 : vector<128x1xf32>
    %6 = vector.broadcast %5 : vector<128x1xf32> to vector<128x64xf32>
    %7 = arith.mulf %0, %6 : vector<128x64xf32>
    %8 = math.log1p %7 : vector<128x64xf32>
    %9 = arith.truncf %8 : vector<128x64xf32> to vector<128x64xbf16>
    %c0_2 = arith.constant 0 : index
    %c0_3 = arith.constant 0 : index
    %10 = vector.load %arg2[%c0_2, %c0_3] : memref<64x128xbf16, #tpu.memory_space<vmem>>, vector<64x128xbf16>
    %cst_4 = arith.constant dense<0.000000e+00> : vector<128x128xf32>
    %11 = tpu.matmul %9, %10, %cst_4 {dimension_numbers = #tpu.dot_dimension_numbers<[1], [0], [0], [1], [0, 0, 1, 1], [], []>} : vector<128x64xbf16>, vector<64x128xbf16>, vector<128x128xf32> -> vector<128x128xf32>
    %c0_5 = arith.constant 0 : index
    %c0_6 = arith.constant 0 : index
    %12 = vector.load %arg3[%c0_5, %c0_6] : memref<1x128xf32, #tpu.memory_space<vmem>>, vector<1x128xf32>
    %13 = vector.broadcast %12 : vector<1x128xf32> to vector<128x128xf32>
    %14 = arith.addf %11, %13 : vector<128x128xf32>
    %cst_7 = arith.constant 0.000000e+00 : f32
    %15 = vector.broadcast %cst_7 : f32 to vector<128x128xf32>
    %16 = arith.cmpf oge, %14, %15 : vector<128x128xf32>
    %cst_8 = arith.constant 2.000000e-01 : f32
    %17 = vector.broadcast %cst_8 : f32 to vector<128x128xf32>
    %18 = arith.mulf %17, %14 : vector<128x128xf32>
    %19 = arith.select %16, %14, %18 : vector<128x128xi1>, vector<128x128xf32>
    %20 = arith.truncf %19 : vector<128x128xf32> to vector<128x128xbf16>
    %c0_9 = arith.constant 0 : index
    %c0_10 = arith.constant 0 : index
    %21 = vector.load %arg4[%c0_9, %c0_10] : memref<128x128xbf16, #tpu.memory_space<vmem>>, vector<128x128xbf16>
    %cst_11 = arith.constant dense<0.000000e+00> : vector<128x128xf32>
    %22 = tpu.matmul %20, %21, %cst_11 {dimension_numbers = #tpu.dot_dimension_numbers<[1], [0], [0], [1], [0, 0, 1, 1], [], []>} : vector<128x128xbf16>, vector<128x128xbf16>, vector<128x128xf32> -> vector<128x128xf32>
    %c0_12 = arith.constant 0 : index
    %c0_13 = arith.constant 0 : index
    %23 = vector.load %arg5[%c0_12, %c0_13] : memref<1x128xf32, #tpu.memory_space<vmem>>, vector<1x128xf32>
    %24 = vector.broadcast %23 : vector<1x128xf32> to vector<128x128xf32>
    %25 = arith.addf %22, %24 : vector<128x128xf32>
    %cst_14 = arith.constant 0.000000e+00 : f32
    %26 = vector.broadcast %cst_14 : f32 to vector<128x128xf32>
    %27 = arith.cmpf oge, %25, %26 : vector<128x128xf32>
    %cst_15 = arith.constant 2.000000e-01 : f32
    %28 = vector.broadcast %cst_15 : f32 to vector<128x128xf32>
    %29 = arith.mulf %28, %25 : vector<128x128xf32>
    %30 = arith.select %27, %25, %29 : vector<128x128xi1>, vector<128x128xf32>
    %31 = arith.truncf %30 : vector<128x128xf32> to vector<128x128xbf16>
    %c0_16 = arith.constant 0 : index
    %c0_17 = arith.constant 0 : index
    %32 = vector.load %arg6[%c0_16, %c0_17] : memref<128x128xbf16, #tpu.memory_space<vmem>>, vector<128x128xbf16>
    %cst_18 = arith.constant dense<0.000000e+00> : vector<128x128xf32>
    %33 = tpu.matmul %31, %32, %cst_18 {dimension_numbers = #tpu.dot_dimension_numbers<[1], [0], [0], [1], [0, 0, 1, 1], [], []>} : vector<128x128xbf16>, vector<128x128xbf16>, vector<128x128xf32> -> vector<128x128xf32>
    %c0_19 = arith.constant 0 : index
    %c0_20 = arith.constant 0 : index
    %34 = vector.load %arg7[%c0_19, %c0_20] : memref<1x128xf32, #tpu.memory_space<vmem>>, vector<1x128xf32>
    %35 = vector.broadcast %34 : vector<1x128xf32> to vector<128x128xf32>
    %36 = arith.addf %33, %35 : vector<128x128xf32>
    %37 = tpu.iota {dimensions = array<i32: 1>} : vector<128x128xi32>
    %cst_21 = arith.constant 0.000000e+00 : f32
    %38 = vector.broadcast %cst_21 : f32 to vector<128x128xf32>
    %39 = arith.maximumf %36, %38 : vector<128x128xf32>
    %40 = vector.broadcast %cst_21 : f32 to vector<128x128xf32>
    %41 = arith.subf %36, %40 : vector<128x128xf32>
    %42 = arith.cmpf one, %41, %41 : vector<128x128xf32>
    %43 = vector.broadcast %cst_21 : f32 to vector<128x128xf32>
    %44 = arith.addf %36, %43 : vector<128x128xf32>
    %45 = math.absf %41 : vector<128x128xf32>
    %cst_22 = arith.constant 0.000000e+00 : f32
    %46 = vector.broadcast %cst_22 : f32 to vector<128x128xf32>
    %47 = arith.subf %46, %45 : vector<128x128xf32>
    %48 = math.exp %47 : vector<128x128xf32>
    %49 = math.log1p %48 : vector<128x128xf32>
    %50 = arith.addf %39, %49 : vector<128x128xf32>
    %51 = arith.select %42, %44, %50 : vector<128x128xi1>, vector<128x128xf32>
    %cst_23 = arith.constant 1.000000e-07 : f32
    %52 = vector.broadcast %cst_23 : f32 to vector<128x128xf32>
    %53 = arith.addf %51, %52 : vector<128x128xf32>
    %54 = vector.shape_cast %2 : vector<128x1xf32> to vector<128x1xf32>
    %55 = vector.broadcast %54 : vector<128x1xf32> to vector<128x128xf32>
    %c16_i32 = arith.constant 16 : i32
    %56 = vector.broadcast %c16_i32 : i32 to vector<128x128xi32>
    %57 = arith.cmpi slt, %37, %56 : vector<128x128xi32>
    %c32_i32 = arith.constant 32 : i32
    %58 = vector.broadcast %c32_i32 : i32 to vector<128x128xi32>
    %59 = arith.cmpi slt, %37, %58 : vector<128x128xi32>
    %c32_i32_24 = arith.constant 32 : i32
    %60 = vector.broadcast %c32_i32_24 : i32 to vector<128x128xi32>
    %61 = arith.cmpi eq, %37, %60 : vector<128x128xi32>
    %cst_25 = arith.constant 0.000000e+00 : f32
    %62 = vector.broadcast %cst_25 : f32 to vector<128x128xf32>
    %63 = arith.select %61, %55, %62 : vector<128x128xi1>, vector<128x128xf32>
    %64 = arith.select %59, %53, %63 : vector<128x128xi1>, vector<128x128xf32>
    %65 = arith.select %57, %36, %64 : vector<128x128xi1>, vector<128x128xf32>
    %c0_26 = arith.constant 0 : index
    %c0_27 = arith.constant 0 : index
    %66 = vector.load %arg8[%c0_26, %c0_27] : memref<128x128xf32, #tpu.memory_space<vmem>>, vector<128x128xf32>
    tpu.vector_store %arg8[%c0_26, %c0_27], %65 {strides = array<i32>} : memref<128x128xf32, #tpu.memory_space<vmem>>, vector<128x128xf32>,
    return
  }
  func.func @transform_0(%arg0: i32) -> (i32, i32) {
    %c0_i32 = arith.constant 0 : i32
    %c0_i32_0 = arith.constant 0 : i32
    return %arg0, %c0_i32 : i32, i32
  }
  func.func @transform_1(%arg0: i32) -> (i32, i32) {
    %c0_i32 = arith.constant 0 : i32
    %c0_i32_0 = arith.constant 0 : i32
    %c0_i32_1 = arith.constant 0 : i32
    return %c0_i32, %c0_i32_0 : i32, i32
  }
  func.func @transform_2(%arg0: i32) -> (i32, i32) {
    %c0_i32 = arith.constant 0 : i32
    %c0_i32_0 = arith.constant 0 : i32
    %c0_i32_1 = arith.constant 0 : i32
    return %c0_i32, %c0_i32_0 : i32, i32
  }
  func.func @transform_3(%arg0: i32) -> (i32, i32) {
    %c0_i32 = arith.constant 0 : i32
    %c0_i32_0 = arith.constant 0 : i32
    %c0_i32_1 = arith.constant 0 : i32
    return %c0_i32, %c0_i32_0 : i32, i32
  }
  func.func @transform_4(%arg0: i32) -> (i32, i32) {
    %c0_i32 = arith.constant 0 : i32
    %c0_i32_0 = arith.constant 0 : i32
    %c0_i32_1 = arith.constant 0 : i32
    return %c0_i32, %c0_i32_0 : i32, i32
  }
  func.func @transform_5(%arg0: i32) -> (i32, i32) {
    %c0_i32 = arith.constant 0 : i32
    %c0_i32_0 = arith.constant 0 : i32
    %c0_i32_1 = arith.constant 0 : i32
    return %c0_i32, %c0_i32_0 : i32, i32
  }
  func.func @transform_6(%arg0: i32) -> (i32, i32) {
    %c0_i32 = arith.constant 0 : i32
    %c0_i32_0 = arith.constant 0 : i32
    %c0_i32_1 = arith.constant 0 : i32
    return %c0_i32, %c0_i32_0 : i32, i32
  }
  func.func @transform_7(%arg0: i32) -> (i32, i32) {
    %c0_i32 = arith.constant 0 : i32
    %c0_i32_0 = arith.constant 0 : i32
    return %arg0, %c0_i32 : i32, i32
  }
}

</mosaic_0001>

<llo_original>
// kernel: tpu_custom_call.1
$region0: #{tpu_custom_call.1}
  #allocation0 [shape = 'u32[]', space=smem, size = 0x4, offset = 0x4, fixed_abs, tag = 'smem constant byte address 0x4 - core index']
  #allocation1 [shape = 'u32[144,128]{1,0:T(1,128)}', space=vmem, size = 0x12000, scoped, tag = 'internal scratch']
  %s0 = inlined_call_operand.vmem [shape: f32[256,64], index: 0, kind: input, shape index: {}]
  %s1 = inlined_call_operand.vmem [shape: bf16[64,128], index: 1, kind: input, shape index: {}]
  %s2 = inlined_call_operand.vmem [shape: f32[1,128], index: 2, kind: input, shape index: {}]
  %s3 = inlined_call_operand.vmem [shape: bf16[128,128], index: 3, kind: input, shape index: {}]
  %s4 = inlined_call_operand.vmem [shape: f32[1,128], index: 4, kind: input, shape index: {}]
  %s5 = inlined_call_operand.vmem [shape: bf16[128,128], index: 5, kind: input, shape index: {}]
  %s6 = inlined_call_operand.vmem [shape: f32[1,128], index: 6, kind: input, shape index: {}]
  %s7 = inlined_call_operand.hbm [shape: f32[256,128], index: 7, kind: output, shape index: {}]
  %s8 = sld [smem:[#allocation0]]
  $region61: #{tpu_custom_call.1} parent=0
    _
  %s10 = ssub.s32 1, %s8
  %s11 = scalar_select 0, %s10, %s8
  $region1: #{tpu_custom_call.1} parent=0
    #allocation2 [shape = 'u8[131072]{0}', space=vmem, size = 0x20000, scoped, tag = 'output window, operand 0']
    #allocation3 [shape = 's32[2]{0}', space=sflag, size = 0x8, scoped, tag = 'scoped memory for tpu_custom_call.1']
    %12 = vsyncpa [#allocation3], 0
    %s13 = scalar_lea.sflag [#allocation3], 1
    %14 = vsyncpa %s13, 0
    loop: start=0, step=1, limit=4
    $region2: #{tpu_custom_call.1} parent=1 // loop_pre_header
      _
    $region3: #{tpu_custom_call.1} parent=1 // loop_header
      %s16 = sphi 0, %s20
      %p17 = scmp.ge.s32.totalorder %s16, 4
      %s26 = sphi 0, %s28
      %s29 = sphi 0, %s26
      %s30 = sphi 0, %s29
      %s46 = sphi 0, %s30
      %s50 = sphi 0, %s50
      %s52 = sphi 0, %s50
      %s53 = sphi 0, %s52
      %s67 = sphi 0, %s53
      %s71 = sphi 0, %s71
      %s73 = sphi 0, %s71
      %s74 = sphi 0, %s73
      %s88 = sphi 0, %s74
      %s92 = sphi 0, %s92
      %s94 = sphi 0, %s92
      %s95 = sphi 0, %s94
      %s109 = sphi 0, %s95
      %s113 = sphi 0, %s113
      %s115 = sphi 0, %s113
      %s116 = sphi 0, %s115
      %s130 = sphi 0, %s116
      %s134 = sphi 0, %s134
      %s136 = sphi 0, %s134
      %s137 = sphi 0, %s136
      %s151 = sphi 0, %s137
      %s155 = sphi 0, %s155
      %s157 = sphi 0, %s155
      %s158 = sphi 0, %s157
      %s172 = sphi 0, %s158
      %s178 = sphi 0, %s180
      %s181 = sphi 0, %s178
      %s182 = sphi 0, %s181
      %s198 = sphi 0, %s182
    $region4: #{tpu_custom_call.1} parent=1 // loop_header_branch
      %19 = sbr.rel (%p17) target = $region8
    $region5: #{tpu_custom_call.1} parent=1 // loop_body
      %s21 = ssub.s32 %s16, 1
      %s22 = ssub.s32 %s16, 2
      %s23 = sadd.s32 %s16, 1
      %s24 = ssub.s32 %s16, %s23
      %p25 = scmp.eq.s32.totalorder %s24, 0
      %s27 = sadd.s32 %s26, 1
      %s28 = scalar_select %p25, %s26, %s27
      %p31 = pneg %p25
      %p32 = scmp.eq.s32.totalorder %s16, 1
      %p33 = por %p31, %p32
      %p34 = scmp.ne.s32.totalorder %s26, %s29
      %p35 = scmp.eq.s32.totalorder %s16, 0
      %p36 = por %p34, %p35
      %p37 = scmp.ne.s32.totalorder %s26, %s29
      %p38 = scmp.eq.s32.totalorder %s21, 1
      %p39 = por %p37, %p38
      %p40 = scmp.ne.s32.totalorder %s29, %s30
      %p41 = scmp.eq.s32.totalorder %s21, 0
      %p42 = por %p40, %p41
      %p43 = scmp.ne.s32.totalorder %s29, %s30
      %p44 = scmp.eq.s32.totalorder %s22, 1
      %p45 = por %p43, %p44
      %p47 = scmp.ne.s32.totalorder %s30, %s46
      %p48 = scmp.eq.s32.totalorder %s22, 0
      %p49 = por %p47, %p48
      %s51 = sadd.s32 %s50, 1
      %p54 = scmp.eq.s32.totalorder %s16, 1
      %p55 = scmp.ne.s32.totalorder %s50, %s52
      %p56 = scmp.eq.s32.totalorder %s16, 0
      %p57 = por %p55, %p56
      %p58 = scmp.ne.s32.totalorder %s50, %s52
      %p59 = scmp.eq.s32.totalorder %s21, 1
      %p60 = por %p58, %p59
      %p61 = scmp.ne.s32.totalorder %s52, %s53
      %p62 = scmp.eq.s32.totalorder %s21, 0
      %p63 = por %p61, %p62
      %p64 = scmp.ne.s32.totalorder %s52, %s53
      %p65 = scmp.eq.s32.totalorder %s22, 1
      %p66 = por %p64, %p65
      %p68 = scmp.ne.s32.totalorder %s53, %s67
      %p69 = scmp.eq.s32.totalorder %s22, 0
      %p70 = por %p68, %p69
      %s72 = sadd.s32 %s71, 1
      %p75 = scmp.eq.s32.totalorder %s16, 1
      %p76 = scmp.ne.s32.totalorder %s71, %s73
      %p77 = scmp.eq.s32.totalorder %s16, 0
      %p78 = por %p76, %p77
      %p79 = scmp.ne.s32.totalorder %s71, %s73
      %p80 = scmp.eq.s32.totalorder %s21, 1
      %p81 = por %p79, %p80
      %p82 = scmp.ne.s32.totalorder %s73, %s74
      %p83 = scmp.eq.s32.totalorder %s21, 0
      %p84 = por %p82, %p83
      %p85 = scmp.ne.s32.totalorder %s73, %s74
      %p86 = scmp.eq.s32.totalorder %s22, 1
      %p87 = por %p85, %p86
      %p89 = scmp.ne.s32.totalorder %s74, %s88
      %p90 = scmp.eq.s32.totalorder %s22, 0
      %p91 = por %p89, %p90
      %s93 = sadd.s32 %s92, 1
      %p96 = scmp.eq.s32.totalorder %s16, 1
      %p97 = scmp.ne.s32.totalorder %s92, %s94
      %p98 = scmp.eq.s32.totalorder %s16, 0
      %p99 = por %p97, %p98
      %p100 = scmp.ne.s32.totalorder %s92, %s94
      %p101 = scmp.eq.s32.totalorder %s21, 1
      %p102 = por %p100, %p101
      %p103 = scmp.ne.s32.totalorder %s94, %s95
      %p104 = scmp.eq.s32.totalorder %s21, 0
      %p105 = por %p103, %p104
      %p106 = scmp.ne.s32.totalorder %s94, %s95
      %p107 = scmp.eq.s32.totalorder %s22, 1
      %p108 = por %p106, %p107
      %p110 = scmp.ne.s32.totalorder %s95, %s109
      %p111 = scmp.eq.s32.totalorder %s22, 0
      %p112 = por %p110, %p111
      %s114 = sadd.s32 %s113, 1
      %p117 = scmp.eq.s32.totalorder %s16, 1
      %p118 = scmp.ne.s32.totalorder %s113, %s115
      %p119 = scmp.eq.s32.totalorder %s16, 0
      %p120 = por %p118, %p119
      %p121 = scmp.ne.s32.totalorder %s113, %s115
      %p122 = scmp.eq.s32.totalorder %s21, 1
      %p123 = por %p121, %p122
      %p124 = scmp.ne.s32.totalorder %s115, %s116
      %p125 = scmp.eq.s32.totalorder %s21, 0
      %p126 = por %p124, %p125
      %p127 = scmp.ne.s32.totalorder %s115, %s116
      %p128 = scmp.eq.s32.totalorder %s22, 1
      %p129 = por %p127, %p128
      %p131 = scmp.ne.s32.totalorder %s116, %s130
      %p132 = scmp.eq.s32.totalorder %s22, 0
      %p133 = por %p131, %p132
      %s135 = sadd.s32 %s134, 1
      %p138 = scmp.eq.s32.totalorder %s16, 1
      %p139 = scmp.ne.s32.totalorder %s134, %s136
      %p140 = scmp.eq.s32.totalorder %s16, 0
      %p141 = por %p139, %p140
      %p142 = scmp.ne.s32.totalorder %s134, %s136
      %p143 = scmp.eq.s32.totalorder %s21, 1
      %p144 = por %p142, %p143
      %p145 = scmp.ne.s32.totalorder %s136, %s137
      %p146 = scmp.eq.s32.totalorder %s21, 0
      %p147 = por %p145, %p146
      %p148 = scmp.ne.s32.totalorder %s136, %s137
      %p149 = scmp.eq.s32.totalorder %s22, 1
      %p150 = por %p148, %p149
      %p152 = scmp.ne.s32.totalorder %s137, %s151
      %p153 = scmp.eq.s32.totalorder %s22, 0
      %p154 = por %p152, %p153
      %s156 = sadd.s32 %s155, 1
      %p159 = scmp.eq.s32.totalorder %s16, 1
      %p160 = scmp.ne.s32.totalorder %s155, %s157
      %p161 = scmp.eq.s32.totalorder %s16, 0
      %p162 = por %p160, %p161
      %p163 = scmp.ne.s32.totalorder %s155, %s157
      %p164 = scmp.eq.s32.totalorder %s21, 1
      %p165 = por %p163, %p164
      %p166 = scmp.ne.s32.totalorder %s157, %s158
      %p167 = scmp.eq.s32.totalorder %s21, 0
      %p168 = por %p166, %p167
      %p169 = scmp.ne.s32.totalorder %s157, %s158
      %p170 = scmp.eq.s32.totalorder %s22, 1
      %p171 = por %p169, %p170
      %p173 = scmp.ne.s32.totalorder %s158, %s172
      %p174 = scmp.eq.s32.totalorder %s22, 0
      %p175 = por %p173, %p174
      %s176 = ssub.s32 %s16, %s23
      %p177 = scmp.eq.s32.totalorder %s176, 0
      %s179 = sadd.s32 %s178, 1
      %s180 = scalar_select %p177, %s178, %s179
      %p183 = pneg %p177
      %p184 = scmp.eq.s32.totalorder %s16, 1
      %p185 = por %p183, %p184
      %p186 = scmp.ne.s32.totalorder %s178, %s181
      %p187 = scmp.eq.s32.totalorder %s16, 0
      %p188 = por %p186, %p187
      %p189 = scmp.ne.s32.totalorder %s178, %s181
      %p190 = scmp.eq.s32.totalorder %s21, 1
      %p191 = por %p189, %p190
      %p192 = scmp.ne.s32.totalorder %s181, %s182
      %p193 = scmp.eq.s32.totalorder %s21, 0
      %p194 = por %p192, %p193
      %p195 = scmp.ne.s32.totalorder %s181, %s182
      %p196 = scmp.eq.s32.totalorder %s22, 1
      %p197 = por %p195, %p196
      %p199 = scmp.ne.s32.totalorder %s182, %s198
      %p200 = scmp.eq.s32.totalorder %s22, 0
      %p201 = por %p199, %p200
      %p202 = scmp.le.s32.totalorder 1, %s16
      %p203 = scmp.lt.s32.totalorder %s16, 3
      %p204 = pnand %p202, %p203
      %p205 = pneg %p204
      // Predicated region
      $region9: #{tpu_custom_call.1} parent=5 // pred_check
        _
      $region10: #{tpu_custom_call.1} parent=5 // pred_check_branch
        %207 = sbr.rel (%p204) target = $region12
      $region11: #{tpu_custom_call.1} parent=5 // pred_region
        %s208 = ssub.s32 %s16, 1
        // Predicated region
        $region13: #{tpu_custom_call.1} parent=11 // pred_check
          %p209 = pneg %p63
        $region14: #{tpu_custom_call.1} parent=11 // pred_check_branch
          %211 = sbr.rel (%p209) target = $region16
        $region15: #{tpu_custom_call.1} parent=11 // pred_region
          _
        $region16: #{tpu_custom_call.1} parent=11 // pred_fallthru
          _
        // Predicated region
        $region17: #{tpu_custom_call.1} parent=11 // pred_check
          %p212 = pneg %p84
        $region18: #{tpu_custom_call.1} parent=11 // pred_check_branch
          %214 = sbr.rel (%p212) target = $region20
        $region19: #{tpu_custom_call.1} parent=11 // pred_region
          _
        $region20: #{tpu_custom_call.1} parent=11 // pred_fallthru
          _
        // Predicated region
        $region21: #{tpu_custom_call.1} parent=11 // pred_check
          %p215 = pneg %p105
        $region22: #{tpu_custom_call.1} parent=11 // pred_check_branch
          %217 = sbr.rel (%p215) target = $region24
        $region23: #{tpu_custom_call.1} parent=11 // pred_region
          _
        $region24: #{tpu_custom_call.1} parent=11 // pred_fallthru
          _
        // Predicated region
        $region25: #{tpu_custom_call.1} parent=11 // pred_check
          %p218 = pneg %p126
        $region26: #{tpu_custom_call.1} parent=11 // pred_check_branch
          %220 = sbr.rel (%p218) target = $region28
        $region27: #{tpu_custom_call.1} parent=11 // pred_region
          _
        $region28: #{tpu_custom_call.1} parent=11 // pred_fallthru
          _
        // Predicated region
        $region29: #{tpu_custom_call.1} parent=11 // pred_check
          %p221 = pneg %p147
        $region30: #{tpu_custom_call.1} parent=11 // pred_check_branch
          %223 = sbr.rel (%p221) target = $region32
        $region31: #{tpu_custom_call.1} parent=11 // pred_region
          _
        $region32: #{tpu_custom_call.1} parent=11 // pred_fallthru
          _
        // Predicated region
        $region33: #{tpu_custom_call.1} parent=11 // pred_check
          %p224 = pneg %p168
        $region34: #{tpu_custom_call.1} parent=11 // pred_check_branch
          %226 = sbr.rel (%p224) target = $region36
        $region35: #{tpu_custom_call.1} parent=11 // pred_region
          _
        $region36: #{tpu_custom_call.1} parent=11 // pred_fallthru
          _
      $region12: #{tpu_custom_call.1} parent=5 // pred_fallthru
        _
      %p227 = scmp.lt.s32.totalorder %s16, 2
      // Predicated region
      $region37: #{tpu_custom_call.1} parent=5 // pred_check
        %p228 = pneg %p227
      $region38: #{tpu_custom_call.1} parent=5 // pred_check_branch
        %230 = sbr.rel (%p228) target = $region40
      $region39: #{tpu_custom_call.1} parent=5 // pred_region
        // Predicated region
        $region41: #{tpu_custom_call.1} parent=39 // pred_check
          %p231 = pneg %p36
        $region42: #{tpu_custom_call.1} parent=39 // pred_check_branch
          %233 = sbr.rel (%p231) target = $region44
        $region43: #{tpu_custom_call.1} parent=39 // pred_region
          %s234 = smul.u32 16, %s16
          %p235 = scmp.lt.s32.totalorder %s234, 31
          %s236 = scalar_select %p235, %s234, 31
          %s237 = smul.addr %s236, 8
          %s238 = scalar_lea.vmem %s0, %s237
          %s239 = smul.u32 16, %s16
        $region44: #{tpu_custom_call.1} parent=39 // pred_fallthru
          _
      $region40: #{tpu_custom_call.1} parent=5 // pred_fallthru
        _
      %p240 = scmp.le.s32.totalorder 1, %s16
      %p241 = scmp.lt.s32.totalorder %s16, 3
      %p242 = pnand %p240, %p241
      %p243 = pneg %p242
      // Predicated region
      $region45: #{tpu_custom_call.1} parent=5 // pred_check
        _
      $region46: #{tpu_custom_call.1} parent=5 // pred_check_branch
        %245 = sbr.rel (%p242) target = $region48
      $region47: #{tpu_custom_call.1} parent=5 // pred_region
        %s246 = ssub.s32 %s16, 1
        %s247 = smul.u32 16, %s21
        %p248 = scmp.lt.s32.totalorder %s247, 31
        %s249 = scalar_select %p248, %s247, 31
        %s250 = smul.addr %s249, 8
        %s251 = scalar_lea.vmem %s0, %s250
        %p252 = pneg %p42
        %p253 = pneg %p39
        %p254 = pneg %p63
        %p255 = pneg %p60
        %p256 = pneg %p84
        %p257 = pneg %p81
        %p258 = pneg %p105
        %p259 = pneg %p102
        %p260 = pneg %p126
        %p261 = pneg %p123
        %p262 = pneg %p147
        %p263 = pneg %p144
        %p264 = pneg %p168
        %p265 = pneg %p165
        %p266 = pneg %p194
        %p267 = pneg %p191
        %s268 = sand.u32 %s181, 1
        %s269 = scalar_lea.sflag [#allocation3], %s268
        %s270 = sand.u32 %s181, 1
        %s271 = smul.addr %s270, 128
        %s272 = scalar_lea.vmem [#allocation2], %s271
        %s273 = smul.u32 16, %s21
        %p274 = scmp.lt.s32.totalorder %s273, 31
        %s275 = scalar_select %p274, %s273, 31
        %s276 = smul.addr %s275, 8
        %s277 = scalar_lea.vmem %s0, %s276
        %s278 = smul.u32 16, %s21
        %s279 = smul.u32 16, %s21
        %v281 = vld [vmem:[%s277] sm:$0xff]
        %v282 = vld [vmem:[%s277 + $0x8] sm:$0xff]
        %v283 = vld [vmem:[%s277 + $0x10] sm:$0xff]
        %v284 = vld [vmem:[%s277 + $0x18] sm:$0xff]
        %v285 = vld [vmem:[%s277 + $0x20] sm:$0xff]
        %v286 = vld [vmem:[%s277 + $0x28] sm:$0xff]
        %v287 = vld [vmem:[%s277 + $0x30] sm:$0xff]
        %v288 = vld [vmem:[%s277 + $0x38] sm:$0xff]
        %v289 = vld [vmem:[%s277 + $0x40] sm:$0xff]
        %v290 = vld [vmem:[%s277 + $0x48] sm:$0xff]
        %v291 = vld [vmem:[%s277 + $0x50] sm:$0xff]
        %v292 = vld [vmem:[%s277 + $0x58] sm:$0xff]
        %v293 = vld [vmem:[%s277 + $0x60] sm:$0xff]
        %v294 = vld [vmem:[%s277 + $0x68] sm:$0xff]
        %v295 = vld [vmem:[%s277 + $0x70] sm:$0xff]
        %v296 = vld [vmem:[%s277 + $0x78] sm:$0xff]
        %vm297 = vcmask 523264
        %v298 = vsel %vm297, %v281, 0.0
        %299 = vadd.xlane.f32.xlu0 %v298
        %v300 = vpop.xlane.xlu0 %299
        %v301 = vsel %vm297, %v282, 0.0
        %302 = vadd.xlane.f32.xlu0 %v301
        %v303 = vpop.xlane.xlu0 %302
        %v304 = vsel %vm297, %v283, 0.0
        %305 = vadd.xlane.f32.xlu0 %v304
        %v306 = vpop.xlane.xlu0 %305
        %v307 = vsel %vm297, %v284, 0.0
        %308 = vadd.xlane.f32.xlu0 %v307
        %v309 = vpop.xlane.xlu0 %308
        %v310 = vsel %vm297, %v285, 0.0
        %311 = vadd.xlane.f32.xlu0 %v310
        %v312 = vpop.xlane.xlu0 %311
        %v313 = vsel %vm297, %v286, 0.0
        %314 = vadd.xlane.f32.xlu0 %v313
        %v315 = vpop.xlane.xlu0 %314
        %v316 = vsel %vm297, %v287, 0.0
        %317 = vadd.xlane.f32.xlu0 %v316
        %v318 = vpop.xlane.xlu0 %317
        %v319 = vsel %vm297, %v288, 0.0
        %320 = vadd.xlane.f32.xlu0 %v319
        %v321 = vpop.xlane.xlu0 %320
        %v322 = vsel %vm297, %v289, 0.0
        %323 = vadd.xlane.f32.xlu0 %v322
        %v324 = vpop.xlane.xlu0 %323
        %v325 = vsel %vm297, %v290, 0.0
        %326 = vadd.xlane.f32.xlu0 %v325
        %v327 = vpop.xlane.xlu0 %326
        %v328 = vsel %vm297, %v291, 0.0
        %329 = vadd.xlane.f32.xlu0 %v328
        %v330 = vpop.xlane.xlu0 %329
        %v331 = vsel %vm297, %v292, 0.0
        %332 = vadd.xlane.f32.xlu0 %v331
        %v333 = vpop.xlane.xlu0 %332
        %v334 = vsel %vm297, %v293, 0.0
        %335 = vadd.xlane.f32.xlu0 %v334
        %v336 = vpop.xlane.xlu0 %335
        %v337 = vsel %vm297, %v294, 0.0
        %338 = vadd.xlane.f32.xlu0 %v337
        %v339 = vpop.xlane.xlu0 %338
        %v340 = vsel %vm297, %v295, 0.0
        %341 = vadd.xlane.f32.xlu0 %v340
        %v342 = vpop.xlane.xlu0 %341
        %v343 = vsel %vm297, %v296, 0.0
        %344 = vadd.xlane.f32.xlu0 %v343
        %v345 = vpop.xlane.xlu0 %344
        %v346 = vrcp.pop %v300
        %v347 = vrcp.pop %v303
        %v348 = vrcp.pop %v306
        %v349 = vrcp.pop %v309
        %v350 = vrcp.pop %v312
        %v351 = vrcp.pop %v315
        %v352 = vrcp.pop %v318
        %v353 = vrcp.pop %v321
        %v354 = vrcp.pop %v324
        %v355 = vrcp.pop %v327
        %v356 = vrcp.pop %v330
        %v357 = vrcp.pop %v333
        %v358 = vrcp.pop %v336
        %v359 = vrcp.pop %v339
        %v360 = vrcp.pop %v342
        %v361 = vrcp.pop %v345
        %v362 = vmul.f32 %v346, 10000.0
        %v363 = vmul.f32 %v347, 10000.0
        %v364 = vmul.f32 %v348, 10000.0
        %v365 = vmul.f32 %v349, 10000.0
        %v366 = vmul.f32 %v350, 10000.0
        %v367 = vmul.f32 %v351, 10000.0
        %v368 = vmul.f32 %v352, 10000.0
        %v369 = vmul.f32 %v353, 10000.0
        %v370 = vmul.f32 %v354, 10000.0
        %v371 = vmul.f32 %v355, 10000.0
        %v372 = vmul.f32 %v356, 10000.0
        %v373 = vmul.f32 %v357, 10000.0
        %v374 = vmul.f32 %v358, 10000.0
        %v375 = vmul.f32 %v359, 10000.0
        %v376 = vmul.f32 %v360, 10000.0
        %v377 = vmul.f32 %v361, 10000.0
        %v378 = vmul.f32 %v281, %v362
        %v379 = vmul.f32 %v282, %v363
        %v380 = vmul.f32 %v283, %v364
        %v381 = vmul.f32 %v284, %v365
        %v382 = vmul.f32 %v285, %v366
        %v383 = vmul.f32 %v286, %v367
        %v384 = vmul.f32 %v287, %v368
        %v385 = vmul.f32 %v288, %v369
        %v386 = vmul.f32 %v289, %v370
        %v387 = vmul.f32 %v290, %v371
        %v388 = vmul.f32 %v291, %v372
        %v389 = vmul.f32 %v292, %v373
        %v390 = vmul.f32 %v293, %v374
        %v391 = vmul.f32 %v294, %v375
        %v392 = vmul.f32 %v295, %v376
        %v393 = vmul.f32 %v296, %v377
        %v394 = vadd.f32 %v378, 1.0
        %v395 = vlog2.pop %v394
        %v396 = vmul.f32 %v395, 0.6931472
        %v397 = vmul.f32 -0.5, %v378
        %v398 = vadd.f32 %v397, 1.0
        %v399 = vmul.f32 %v398, %v378
        %v400 = vand.u32 2147483647, %v378
        %vm401 = vcmp.lt.f32.partialorder %v400, 0.0004427343
        %v402 = vsel %vm401, %v399, %v396
        %v403 = vadd.f32 %v379, 1.0
        %v404 = vlog2.pop %v403
        %v405 = vmul.f32 %v404, 0.6931472
        %v406 = vmul.f32 -0.5, %v379
        %v407 = vadd.f32 %v406, 1.0
        %v408 = vmul.f32 %v407, %v379
        %v409 = vand.u32 2147483647, %v379
        %vm410 = vcmp.lt.f32.partialorder %v409, 0.0004427343
        %v411 = vsel %vm410, %v408, %v405
        %v412 = vadd.f32 %v380, 1.0
        %v413 = vlog2.pop %v412
        %v414 = vmul.f32 %v413, 0.6931472
        %v415 = vmul.f32 -0.5, %v380
        %v416 = vadd.f32 %v415, 1.0
        %v417 = vmul.f32 %v416, %v380
        %v418 = vand.u32 2147483647, %v380
        %vm419 = vcmp.lt.f32.partialorder %v418, 0.0004427343
        %v420 = vsel %vm419, %v417, %v414
        %v421 = vadd.f32 %v381, 1.0
        %v422 = vlog2.pop %v421
        %v423 = vmul.f32 %v422, 0.6931472
        %v424 = vmul.f32 -0.5, %v381
        %v425 = vadd.f32 %v424, 1.0
        %v426 = vmul.f32 %v425, %v381
        %v427 = vand.u32 2147483647, %v381
        %vm428 = vcmp.lt.f32.partialorder %v427, 0.0004427343
        %v429 = vsel %vm428, %v426, %v423
        %v430 = vadd.f32 %v382, 1.0
        %v431 = vlog2.pop %v430
        %v432 = vmul.f32 %v431, 0.6931472
        %v433 = vmul.f32 -0.5, %v382
        %v434 = vadd.f32 %v433, 1.0
        %v435 = vmul.f32 %v434, %v382
        %v436 = vand.u32 2147483647, %v382
        %vm437 = vcmp.lt.f32.partialorder %v436, 0.0004427343
        %v438 = vsel %vm437, %v435, %v432
        %v439 = vadd.f32 %v383, 1.0
        %v440 = vlog2.pop %v439
        %v441 = vmul.f32 %v440, 0.6931472
        %v442 = vmul.f32 -0.5, %v383
        %v443 = vadd.f32 %v442, 1.0
        %v444 = vmul.f32 %v443, %v383
        %v445 = vand.u32 2147483647, %v383
        %vm446 = vcmp.lt.f32.partialorder %v445, 0.0004427343
        %v447 = vsel %vm446, %v444, %v441
        %v448 = vadd.f32 %v384, 1.0
        %v449 = vlog2.pop %v448
        %v450 = vmul.f32 %v449, 0.6931472
        %v451 = vmul.f32 -0.5, %v384
        %v452 = vadd.f32 %v451, 1.0
        %v453 = vmul.f32 %v452, %v384
        %v454 = vand.u32 2147483647, %v384
        %vm455 = vcmp.lt.f32.partialorder %v454, 0.0004427343
        %v456 = vsel %vm455, %v453, %v450
        %v457 = vadd.f32 %v385, 1.0
        %v458 = vlog2.pop %v457
        %v459 = vmul.f32 %v458, 0.6931472
        %v460 = vmul.f32 -0.5, %v385
        %v461 = vadd.f32 %v460, 1.0
        %v462 = vmul.f32 %v461, %v385
        %v463 = vand.u32 2147483647, %v385
        %vm464 = vcmp.lt.f32.partialorder %v463, 0.0004427343
        %v465 = vsel %vm464, %v462, %v459
        %v466 = vadd.f32 %v386, 1.0
        %v467 = vlog2.pop %v466
        %v468 = vmul.f32 %v467, 0.6931472
        %v469 = vmul.f32 -0.5, %v386
        %v470 = vadd.f32 %v469, 1.0
        %v471 = vmul.f32 %v470, %v386
        %v472 = vand.u32 2147483647, %v386
        %vm473 = vcmp.lt.f32.partialorder %v472, 0.0004427343
        %v474 = vsel %vm473, %v471, %v468
        %v475 = vadd.f32 %v387, 1.0
        %v476 = vlog2.pop %v475
        %v477 = vmul.f32 %v476, 0.6931472
        %v478 = vmul.f32 -0.5, %v387
        %v479 = vadd.f32 %v478, 1.0
        %v480 = vmul.f32 %v479, %v387
        %v481 = vand.u32 2147483647, %v387
        %vm482 = vcmp.lt.f32.partialorder %v481, 0.0004427343
        %v483 = vsel %vm482, %v480, %v477
        %v484 = vadd.f32 %v388, 1.0
        %v485 = vlog2.pop %v484
        %v486 = vmul.f32 %v485, 0.6931472
        %v487 = vmul.f32 -0.5, %v388
        %v488 = vadd.f32 %v487, 1.0
        %v489 = vmul.f32 %v488, %v388
        %v490 = vand.u32 2147483647, %v388
        %vm491 = vcmp.lt.f32.partialorder %v490, 0.0004427343
        %v492 = vsel %vm491, %v489, %v486
        %v493 = vadd.f32 %v389, 1.0
        %v494 = vlog2.pop %v493
        %v495 = vmul.f32 %v494, 0.6931472
        %v496 = vmul.f32 -0.5, %v389
        %v497 = vadd.f32 %v496, 1.0
        %v498 = vmul.f32 %v497, %v389
        %v499 = vand.u32 2147483647, %v389
        %vm500 = vcmp.lt.f32.partialorder %v499, 0.0004427343
        %v501 = vsel %vm500, %v498, %v495
        %v502 = vadd.f32 %v390, 1.0
        %v503 = vlog2.pop %v502
        %v504 = vmul.f32 %v503, 0.6931472
        %v505 = vmul.f32 -0.5, %v390
        %v506 = vadd.f32 %v505, 1.0
        %v507 = vmul.f32 %v506, %v390
        %v508 = vand.u32 2147483647, %v390
        %vm509 = vcmp.lt.f32.partialorder %v508, 0.0004427343
        %v510 = vsel %vm509, %v507, %v504
        %v511 = vadd.f32 %v391, 1.0
        %v512 = vlog2.pop %v511
        %v513 = vmul.f32 %v512, 0.6931472
        %v514 = vmul.f32 -0.5, %v391
        %v515 = vadd.f32 %v514, 1.0
        %v516 = vmul.f32 %v515, %v391
        %v517 = vand.u32 2147483647, %v391
        %vm518 = vcmp.lt.f32.partialorder %v517, 0.0004427343
        %v519 = vsel %vm518, %v516, %v513
        %v520 = vadd.f32 %v392, 1.0
        %v521 = vlog2.pop %v520
        %v522 = vmul.f32 %v521, 0.6931472
        %v523 = vmul.f32 -0.5, %v392
        %v524 = vadd.f32 %v523, 1.0
        %v525 = vmul.f32 %v524, %v392
        %v526 = vand.u32 2147483647, %v392
        %vm527 = vcmp.lt.f32.partialorder %v526, 0.0004427343
        %v528 = vsel %vm527, %v525, %v522
        %v529 = vadd.f32 %v393, 1.0
        %v530 = vlog2.pop %v529
        %v531 = vmul.f32 %v530, 0.6931472
        %v532 = vmul.f32 -0.5, %v393
        %v533 = vadd.f32 %v532, 1.0
        %v534 = vmul.f32 %v533, %v393
        %v535 = vand.u32 2147483647, %v393
        %vm536 = vcmp.lt.f32.partialorder %v535, 0.0004427343
        %v537 = vsel %vm536, %v534, %v531
        %v538 = vpack.c.bf16 %v411, %v402
        %v539 = vpack.c.bf16 %v429, %v420
        %v540 = vpack.c.bf16 %v447, %v438
        %v541 = vpack.c.bf16 %v465, %v456
        %v542 = vpack.c.bf16 %v483, %v474
        %v543 = vpack.c.bf16 %v501, %v492
        %v544 = vpack.c.bf16 %v519, %v510
        %v545 = vpack.c.bf16 %v537, %v528
        %v546 = vld [vmem:[%s1] sm:$0xf]
        %v547 = vld [vmem:[%s1 + $0x4] sm:$0xf]
        %v548 = vld [vmem:[%s1 + $0x8] sm:$0xf]
        %v549 = vld [vmem:[%s1 + $0xc] sm:$0xf]
        %v550 = vld [vmem:[%s1 + $0x10] sm:$0xf]
        %v551 = vld [vmem:[%s1 + $0x14] sm:$0xf]
        %v552 = vld [vmem:[%s1 + $0x18] sm:$0xf]
        %v553 = vld [vmem:[%s1 + $0x1c] sm:$0xf]
        %v554 = vld [vmem:[%s2] sm:$0x1]
        %v556 = vlaneseq
        %v557 = vshrl.u32 %v556, 7
        %v558 = vsub.s32 0, %v557
        %v559 = vrot.slane %v554, %v558
        %v569 = vunpack.c.l.b16 %v546
        %v570 = vunpack.c.l.b16 %v547
        %v571 = vunpack.c.l.b16 %v548
        %v572 = vunpack.c.l.b16 %v549
        %v573 = vunpack.c.l.b16 %v550
        %v574 = vunpack.c.l.b16 %v551
        %v575 = vunpack.c.l.b16 %v552
        %v576 = vunpack.c.l.b16 %v553
        %v577 = vpack.c.b16 %v570, %v569
        %v578 = vpack.c.b16 %v572, %v571
        %v579 = vpack.c.b16 %v574, %v573
        %v580 = vpack.c.b16 %v576, %v575
        %v586 = vsel %vm297, %v538, 0
        %v589 = vsel %vm297, %v539, 0
        %v592 = vsel %vm297, %v540, 0
        %v595 = vsel %vm297, %v541, 0
        %v598 = vsel %vm297, %v542, 0
        %v601 = vsel %vm297, %v543, 0
        %v604 = vsel %vm297, %v544, 0
        %v607 = vsel %vm297, %v545, 0
        %609 = vmatprep.subr.bf16.mxu0 0
        %610 = vmatpush1.bf16.msra.mxu0 %v577
        %611 = vmatprep.subr.bf16.mxu0 0
        %612 = vmatpush1.bf16.msra.mxu0 %v578
        %613 = vmatprep.subr.bf16.mxu0 0
        %614 = vmatpush1.bf16.msra.mxu0 %v579
        %615 = vmatprep.subr.bf16.mxu0 0
        %616 = vmatpush1.bf16.msra.mxu0 %v580
        %617 = vmatprep.subr.bf16.mxu0 0
        %618 = vmatpush1.bf16.msra.mxu0 0
        %619 = vmatprep.subr.bf16.mxu0 0
        %620 = vmatpush1.bf16.msra.mxu0 0
        %621 = vmatprep.subr.bf16.mxu0 0
        %622 = vmatpush1.bf16.msra.mxu0 0
        %623 = vmatprep.subr.bf16.mxu0 0
        %624 = vmatpush1.bf16.msra.mxu0 0
        %625 = vmatprep.subr.bf16.mxu0 0
        %626 = vmatpush1.bf16.msra.mxu0 0
        %627 = vmatprep.subr.bf16.mxu0 0
        %628 = vmatpush1.bf16.msra.mxu0 0
        %629 = vmatprep.subr.bf16.mxu0 0
        %630 = vmatpush1.bf16.msra.mxu0 0
        %631 = vmatprep.subr.bf16.mxu0 0
        %632 = vmatpush1.bf16.msra.mxu0 0
        %633 = vmatprep.subr.bf16.mxu0 0
        %634 = vmatpush1.bf16.msra.mxu0 0
        %635 = vmatprep.subr.bf16.mxu0 0
        %636 = vmatpush1.bf16.msra.mxu0 0
        %637 = vmatprep.subr.bf16.mxu0 0
        %638 = vmatpush1.bf16.msra.mxu0 0
        %639 = vmatprep.subr.bf16.mxu0 0
        %640 = vmatpush1.bf16.msra.mxu0 0
        %641 = vmatprep.mubr.bf16.mxu0 0
        %642 = vmatmul.mubr.bf16.gmra.mrb[0].mxu0 %v586
        %v643 = vpop.f32.mrb[0].mxu0
        %v644 = vadd.f32 %v559, %v643
        %v645 = vpop.f32.mrb[0].mxu0
        %v646 = vpop.f32.mrb[0].mxu0
        %v647 = vadd.f32 %v559, %v646
        %v648 = vpop.f32.mrb[0].mxu0
        %649 = vmatprep.mubr.bf16.mxu0 0
        %650 = vmatmul.mubr.bf16.gmra.mrb[0].mxu0 %v589
        %v651 = vpop.f32.mrb[0].mxu0
        %v652 = vadd.f32 %v559, %v651
        %v653 = vpop.f32.mrb[0].mxu0
        %v654 = vpop.f32.mrb[0].mxu0
        %v655 = vadd.f32 %v559, %v654
        %v656 = vpop.f32.mrb[0].mxu0
        %657 = vmatprep.mubr.bf16.mxu0 0
        %658 = vmatmul.mubr.bf16.gmra.mrb[0].mxu0 %v592
        %v659 = vpop.f32.mrb[0].mxu0
        %v660 = vadd.f32 %v559, %v659
        %v661 = vpop.f32.mrb[0].mxu0
        %v662 = vpop.f32.mrb[0].mxu0
        %v663 = vadd.f32 %v559, %v662
        %v664 = vpop.f32.mrb[0].mxu0
        %665 = vmatprep.mubr.bf16.mxu0 0
        %666 = vmatmul.mubr.bf16.gmra.mrb[0].mxu0 %v595
        %v667 = vpop.f32.mrb[0].mxu0
        %v668 = vadd.f32 %v559, %v667
        %v669 = vpop.f32.mrb[0].mxu0
        %v670 = vpop.f32.mrb[0].mxu0
        %v671 = vadd.f32 %v559, %v670
        %v672 = vpop.f32.mrb[0].mxu0
        %673 = vmatprep.mubr.bf16.mxu0 0
        %674 = vmatmul.mubr.bf16.gmra.mrb[0].mxu0 %v598
        %v675 = vpop.f32.mrb[0].mxu0
        %v676 = vadd.f32 %v559, %v675
        %v677 = vpop.f32.mrb[0].mxu0
        %v678 = vpop.f32.mrb[0].mxu0
        %v679 = vadd.f32 %v559, %v678
        %v680 = vpop.f32.mrb[0].mxu0
        %681 = vmatprep.mubr.bf16.mxu0 0
        %682 = vmatmul.mubr.bf16.gmra.mrb[0].mxu0 %v601
        %v683 = vpop.f32.mrb[0].mxu0
        %v684 = vadd.f32 %v559, %v683
        %v685 = vpop.f32.mrb[0].mxu0
        %v686 = vpop.f32.mrb[0].mxu0
        %v687 = vadd.f32 %v559, %v686
        %v688 = vpop.f32.mrb[0].mxu0
        %689 = vmatprep.mubr.bf16.mxu0 0
        %690 = vmatmul.mubr.bf16.gmra.mrb[0].mxu0 %v604
        %v691 = vpop.f32.mrb[0].mxu0
        %v692 = vadd.f32 %v559, %v691
        %v693 = vpop.f32.mrb[0].mxu0
        %v694 = vpop.f32.mrb[0].mxu0
        %v695 = vadd.f32 %v559, %v694
        %v696 = vpop.f32.mrb[0].mxu0
        %697 = vmatprep.mubr.bf16.mxu0 0
        %698 = vmatmul.mubr.bf16.gmra.mrb[0].mxu0 %v607
        %v699 = vpop.f32.mrb[0].mxu0
        %v700 = vadd.f32 %v559, %v699
        %v701 = vpop.f32.mrb[0].mxu0
        %v702 = vpop.f32.mrb[0].mxu0
        %v703 = vadd.f32 %v559, %v702
        %v704 = vpop.f32.mrb[0].mxu0
        %705 = vdwg.mxu0
        %vm706 = vcmp.ge.f32.partialorder %v644, 0.0
        %vm707 = vcmp.ge.f32.partialorder %v647, 0.0
        %vm708 = vcmp.ge.f32.partialorder %v652, 0.0
        %vm709 = vcmp.ge.f32.partialorder %v655, 0.0
        %vm710 = vcmp.ge.f32.partialorder %v660, 0.0
        %vm711 = vcmp.ge.f32.partialorder %v663, 0.0
        %vm712 = vcmp.ge.f32.partialorder %v668, 0.0
        %vm713 = vcmp.ge.f32.partialorder %v671, 0.0
        %vm714 = vcmp.ge.f32.partialorder %v676, 0.0
        %vm715 = vcmp.ge.f32.partialorder %v679, 0.0
        %vm716 = vcmp.ge.f32.partialorder %v684, 0.0
        %vm717 = vcmp.ge.f32.partialorder %v687, 0.0
        %vm718 = vcmp.ge.f32.partialorder %v692, 0.0
        %vm719 = vcmp.ge.f32.partialorder %v695, 0.0
        %vm720 = vcmp.ge.f32.partialorder %v700, 0.0
        %vm721 = vcmp.ge.f32.partialorder %v703, 0.0
        %v722 = vmul.f32 %v644, 0.2
        %v723 = vmul.f32 %v647, 0.2
        %v724 = vmul.f32 %v652, 0.2
        %v725 = vmul.f32 %v655, 0.2
        %v726 = vmul.f32 %v660, 0.2
        %v727 = vmul.f32 %v663, 0.2
        %v728 = vmul.f32 %v668, 0.2
        %v729 = vmul.f32 %v671, 0.2
        %v730 = vmul.f32 %v676, 0.2
        %v731 = vmul.f32 %v679, 0.2
        %v732 = vmul.f32 %v684, 0.2
        %v733 = vmul.f32 %v687, 0.2
        %v734 = vmul.f32 %v692, 0.2
        %v735 = vmul.f32 %v695, 0.2
        %v736 = vmul.f32 %v700, 0.2
        %v737 = vmul.f32 %v703, 0.2
        %v738 = vsel %vm706, %v644, %v722
        %v739 = vsel %vm707, %v647, %v723
        %v740 = vsel %vm708, %v652, %v724
        %v741 = vsel %vm709, %v655, %v725
        %v742 = vsel %vm710, %v660, %v726
        %v743 = vsel %vm711, %v663, %v727
        %v744 = vsel %vm712, %v668, %v728
        %v745 = vsel %vm713, %v671, %v729
        %v746 = vsel %vm714, %v676, %v730
        %v747 = vsel %vm715, %v679, %v731
        %v748 = vsel %vm716, %v684, %v732
        %v749 = vsel %vm717, %v687, %v733
        %v750 = vsel %vm718, %v692, %v734
        %v751 = vsel %vm719, %v695, %v735
        %v752 = vsel %vm720, %v700, %v736
        %v753 = vsel %vm721, %v703, %v737
        %v754 = vpack.c.bf16 %v739, %v738
        %v755 = vpack.c.bf16 %v741, %v740
        %v756 = vpack.c.bf16 %v743, %v742
        %v757 = vpack.c.bf16 %v745, %v744
        %v758 = vpack.c.bf16 %v747, %v746
        %v759 = vpack.c.bf16 %v749, %v748
        %v760 = vpack.c.bf16 %v751, %v750
        %v761 = vpack.c.bf16 %v753, %v752
        %v762 = vld [vmem:[%s3] sm:$0xf]
        %v763 = vld [vmem:[%s3 + $0x4] sm:$0xf]
        %v764 = vld [vmem:[%s3 + $0x8] sm:$0xf]
        %v765 = vld [vmem:[%s3 + $0xc] sm:$0xf]
        %v766 = vld [vmem:[%s3 + $0x10] sm:$0xf]
        %v767 = vld [vmem:[%s3 + $0x14] sm:$0xf]
        %v768 = vld [vmem:[%s3 + $0x18] sm:$0xf]
        %v769 = vld [vmem:[%s3 + $0x1c] sm:$0xf]
        %v770 = vld [vmem:[%s3 + $0x20] sm:$0xf]
        %v771 = vld [vmem:[%s3 + $0x24] sm:$0xf]
        %v772 = vld [vmem:[%s3 + $0x28] sm:$0xf]
        %v773 = vld [vmem:[%s3 + $0x2c] sm:$0xf]
        %v774 = vld [vmem:[%s3 + $0x30] sm:$0xf]
        %v775 = vld [vmem:[%s3 + $0x34] sm:$0xf]
        %v776 = vld [vmem:[%s3 + $0x38] sm:$0xf]
        %v777 = vld [vmem:[%s3 + $0x3c] sm:$0xf]
        %v778 = vld [vmem:[%s4] sm:$0x1]
        %v780 = vlaneseq
        %v781 = vshrl.u32 %v780, 7
        %v782 = vsub.s32 0, %v781
        %v783 = vrot.slane %v778, %v782
        %v801 = vunpack.c.l.b16 %v762
        %v802 = vunpack.c.l.b16 %v763
        %v803 = vunpack.c.l.b16 %v764
        %v804 = vunpack.c.l.b16 %v765
        %v805 = vunpack.c.l.b16 %v766
        %v806 = vunpack.c.l.b16 %v767
        %v807 = vunpack.c.l.b16 %v768
        %v808 = vunpack.c.l.b16 %v769
        %v809 = vunpack.c.l.b16 %v770
        %v810 = vunpack.c.l.b16 %v771
        %v811 = vunpack.c.l.b16 %v772
        %v812 = vunpack.c.l.b16 %v773
        %v813 = vunpack.c.l.b16 %v774
        %v814 = vunpack.c.l.b16 %v775
        %v815 = vunpack.c.l.b16 %v776
        %v816 = vunpack.c.l.b16 %v777
        %v817 = vpack.c.b16 %v802, %v801
        %v818 = vpack.c.b16 %v804, %v803
        %v819 = vpack.c.b16 %v806, %v805
        %v820 = vpack.c.b16 %v808, %v807
        %v821 = vpack.c.b16 %v810, %v809
        %v822 = vpack.c.b16 %v812, %v811
        %v823 = vpack.c.b16 %v814, %v813
        %v824 = vpack.c.b16 %v816, %v815
        %833 = vmatprep.subr.bf16.mxu0 0
        %834 = vmatpush1.bf16.msra.mxu0 %v817
        %835 = vmatprep.subr.bf16.mxu0 0
        %836 = vmatpush1.bf16.msra.mxu0 %v818
        %837 = vmatprep.subr.bf16.mxu0 0
        %838 = vmatpush1.bf16.msra.mxu0 %v819
        %839 = vmatprep.subr.bf16.mxu0 0
        %840 = vmatpush1.bf16.msra.mxu0 %v820
        %841 = vmatprep.subr.bf16.mxu0 0
        %842 = vmatpush1.bf16.msra.mxu0 %v821
        %843 = vmatprep.subr.bf16.mxu0 0
        %844 = vmatpush1.bf16.msra.mxu0 %v822
        %845 = vmatprep.subr.bf16.mxu0 0
        %846 = vmatpush1.bf16.msra.mxu0 %v823
        %847 = vmatprep.subr.bf16.mxu0 0
        %848 = vmatpush1.bf16.msra.mxu0 %v824
        %849 = vmatprep.subr.bf16.mxu0 0
        %850 = vmatpush1.bf16.msra.mxu0 0
        %851 = vmatprep.subr.bf16.mxu0 0
        %852 = vmatpush1.bf16.msra.mxu0 0
        %853 = vmatprep.subr.bf16.mxu0 0
        %854 = vmatpush1.bf16.msra.mxu0 0
        %855 = vmatprep.subr.bf16.mxu0 0
        %856 = vmatpush1.bf16.msra.mxu0 0
        %857 = vmatprep.subr.bf16.mxu0 0
        %858 = vmatpush1.bf16.msra.mxu0 0
        %859 = vmatprep.subr.bf16.mxu0 0
        %860 = vmatpush1.bf16.msra.mxu0 0
        %861 = vmatprep.subr.bf16.mxu0 0
        %862 = vmatpush1.bf16.msra.mxu0 0
        %863 = vmatprep.subr.bf16.mxu0 0
        %864 = vmatpush1.bf16.msra.mxu0 0
        %865 = vmatprep.mubr.bf16.mxu0 0
        %866 = vmatmul.mubr.bf16.gmra.mrb[0].mxu0 %v754
        %v867 = vpop.f32.mrb[0].mxu0
        %v868 = vadd.f32 %v783, %v867
        %v869 = vpop.f32.mrb[0].mxu0
        %v870 = vpop.f32.mrb[0].mxu0
        %v871 = vadd.f32 %v783, %v870
        %v872 = vpop.f32.mrb[0].mxu0
        %873 = vmatprep.mubr.bf16.mxu0 0
        %874 = vmatmul.mubr.bf16.gmra.mrb[0].mxu0 %v755
        %v875 = vpop.f32.mrb[0].mxu0
        %v876 = vadd.f32 %v783, %v875
        %v877 = vpop.f32.mrb[0].mxu0
        %v878 = vpop.f32.mrb[0].mxu0
        %v879 = vadd.f32 %v783, %v878
        %v880 = vpop.f32.mrb[0].mxu0
        %881 = vmatprep.mubr.bf16.mxu0 0
        %882 = vmatmul.mubr.bf16.gmra.mrb[0].mxu0 %v756
        %v883 = vpop.f32.mrb[0].mxu0
        %v884 = vadd.f32 %v783, %v883
        %v885 = vpop.f32.mrb[0].mxu0
        %v886 = vpop.f32.mrb[0].mxu0
        %v887 = vadd.f32 %v783, %v886
        %v888 = vpop.f32.mrb[0].mxu0
        %889 = vmatprep.mubr.bf16.mxu0 0
        %890 = vmatmul.mubr.bf16.gmra.mrb[0].mxu0 %v757
        %v891 = vpop.f32.mrb[0].mxu0
        %v892 = vadd.f32 %v783, %v891
        %v893 = vpop.f32.mrb[0].mxu0
        %v894 = vpop.f32.mrb[0].mxu0
        %v895 = vadd.f32 %v783, %v894
        %v896 = vpop.f32.mrb[0].mxu0
        %897 = vmatprep.mubr.bf16.mxu0 0
        %898 = vmatmul.mubr.bf16.gmra.mrb[0].mxu0 %v758
        %v899 = vpop.f32.mrb[0].mxu0
        %v900 = vadd.f32 %v783, %v899
        %v901 = vpop.f32.mrb[0].mxu0
        %v902 = vpop.f32.mrb[0].mxu0
        %v903 = vadd.f32 %v783, %v902
        %v904 = vpop.f32.mrb[0].mxu0
        %905 = vmatprep.mubr.bf16.mxu0 0
        %906 = vmatmul.mubr.bf16.gmra.mrb[0].mxu0 %v759
        %v907 = vpop.f32.mrb[0].mxu0
        %v908 = vadd.f32 %v783, %v907
        %v909 = vpop.f32.mrb[0].mxu0
        %v910 = vpop.f32.mrb[0].mxu0
        %v911 = vadd.f32 %v783, %v910
        %v912 = vpop.f32.mrb[0].mxu0
        %913 = vmatprep.mubr.bf16.mxu0 0
        %914 = vmatmul.mubr.bf16.gmra.mrb[0].mxu0 %v760
        %v915 = vpop.f32.mrb[0].mxu0
        %v916 = vadd.f32 %v783, %v915
        %v917 = vpop.f32.mrb[0].mxu0
        %v918 = vpop.f32.mrb[0].mxu0
        %v919 = vadd.f32 %v783, %v918
        %v920 = vpop.f32.mrb[0].mxu0
        %921 = vmatprep.mubr.bf16.mxu0 0
        %922 = vmatmul.mubr.bf16.gmra.mrb[0].mxu0 %v761
        %v923 = vpop.f32.mrb[0].mxu0
        %v924 = vadd.f32 %v783, %v923
        %v925 = vpop.f32.mrb[0].mxu0
        %v926 = vpop.f32.mrb[0].mxu0
        %v927 = vadd.f32 %v783, %v926
        %v928 = vpop.f32.mrb[0].mxu0
        %929 = vdwg.mxu0
        %vm930 = vcmp.ge.f32.partialorder %v868, 0.0
        %vm931 = vcmp.ge.f32.partialorder %v871, 0.0
        %vm932 = vcmp.ge.f32.partialorder %v876, 0.0
        %vm933 = vcmp.ge.f32.partialorder %v879, 0.0
        %vm934 = vcmp.ge.f32.partialorder %v884, 0.0
        %vm935 = vcmp.ge.f32.partialorder %v887, 0.0
        %vm936 = vcmp.ge.f32.partialorder %v892, 0.0
        %vm937 = vcmp.ge.f32.partialorder %v895, 0.0
        %vm938 = vcmp.ge.f32.partialorder %v900, 0.0
        %vm939 = vcmp.ge.f32.partialorder %v903, 0.0
        %vm940 = vcmp.ge.f32.partialorder %v908, 0.0
        %vm941 = vcmp.ge.f32.partialorder %v911, 0.0
        %vm942 = vcmp.ge.f32.partialorder %v916, 0.0
        %vm943 = vcmp.ge.f32.partialorder %v919, 0.0
        %vm944 = vcmp.ge.f32.partialorder %v924, 0.0
        %vm945 = vcmp.ge.f32.partialorder %v927, 0.0
        %v946 = vmul.f32 %v868, 0.2
        %v947 = vmul.f32 %v871, 0.2
        %v948 = vmul.f32 %v876, 0.2
        %v949 = vmul.f32 %v879, 0.2
        %v950 = vmul.f32 %v884, 0.2
        %v951 = vmul.f32 %v887, 0.2
        %v952 = vmul.f32 %v892, 0.2
        %v953 = vmul.f32 %v895, 0.2
        %v954 = vmul.f32 %v900, 0.2
        %v955 = vmul.f32 %v903, 0.2
        %v956 = vmul.f32 %v908, 0.2
        %v957 = vmul.f32 %v911, 0.2
        %v958 = vmul.f32 %v916, 0.2
        %v959 = vmul.f32 %v919, 0.2
        %v960 = vmul.f32 %v924, 0.2
        %v961 = vmul.f32 %v927, 0.2
        %v962 = vsel %vm930, %v868, %v946
        %v963 = vsel %vm931, %v871, %v947
        %v964 = vsel %vm932, %v876, %v948
        %v965 = vsel %vm933, %v879, %v949
        %v966 = vsel %vm934, %v884, %v950
        %v967 = vsel %vm935, %v887, %v951
        %v968 = vsel %vm936, %v892, %v952
        %v969 = vsel %vm937, %v895, %v953
        %v970 = vsel %vm938, %v900, %v954
        %v971 = vsel %vm939, %v903, %v955
        %v972 = vsel %vm940, %v908, %v956
        %v973 = vsel %vm941, %v911, %v957
        %v974 = vsel %vm942, %v916, %v958
        %v975 = vsel %vm943, %v919, %v959
        %v976 = vsel %vm944, %v924, %v960
        %v977 = vsel %vm945, %v927, %v961
        %v978 = vpack.c.bf16 %v963, %v962
        %v979 = vpack.c.bf16 %v965, %v964
        %v980 = vpack.c.bf16 %v967, %v966
        %v981 = vpack.c.bf16 %v969, %v968
        %v982 = vpack.c.bf16 %v971, %v970
        %v983 = vpack.c.bf16 %v973, %v972
        %v984 = vpack.c.bf16 %v975, %v974
        %v985 = vpack.c.bf16 %v977, %v976
        %v986 = vld [vmem:[%s5] sm:$0xf]
        %v987 = vld [vmem:[%s5 + $0x4] sm:$0xf]
        %v988 = vld [vmem:[%s5 + $0x8] sm:$0xf]
        %v989 = vld [vmem:[%s5 + $0xc] sm:$0xf]
        %v990 = vld [vmem:[%s5 + $0x10] sm:$0xf]
        %v991 = vld [vmem:[%s5 + $0x14] sm:$0xf]
        %v992 = vld [vmem:[%s5 + $0x18] sm:$0xf]
        %v993 = vld [vmem:[%s5 + $0x1c] sm:$0xf]
        %v994 = vld [vmem:[%s5 + $0x20] sm:$0xf]
        %v995 = vld [vmem:[%s5 + $0x24] sm:$0xf]
        %v996 = vld [vmem:[%s5 + $0x28] sm:$0xf]
        %v997 = vld [vmem:[%s5 + $0x2c] sm:$0xf]
        %v998 = vld [vmem:[%s5 + $0x30] sm:$0xf]
        %v999 = vld [vmem:[%s5 + $0x34] sm:$0xf]
        %v1000 = vld [vmem:[%s5 + $0x38] sm:$0xf]
        %v1001 = vld [vmem:[%s5 + $0x3c] sm:$0xf]
        %v1002 = vld [vmem:[%s6] sm:$0x1]
        %v1004 = vlaneseq
        %v1005 = vshrl.u32 %v1004, 7
        %v1006 = vsub.s32 0, %v1005
        %v1007 = vrot.slane %v1002, %v1006
        %v1025 = vunpack.c.l.b16 %v986
        %v1026 = vunpack.c.l.b16 %v987
        %v1027 = vunpack.c.l.b16 %v988
        %v1028 = vunpack.c.l.b16 %v989
        %v1029 = vunpack.c.l.b16 %v990
        %v1030 = vunpack.c.l.b16 %v991
        %v1031 = vunpack.c.l.b16 %v992
        %v1032 = vunpack.c.l.b16 %v993
        %v1033 = vunpack.c.l.b16 %v994
        %v1034 = vunpack.c.l.b16 %v995
        %v1035 = vunpack.c.l.b16 %v996
        %v1036 = vunpack.c.l.b16 %v997
        %v1037 = vunpack.c.l.b16 %v998
        %v1038 = vunpack.c.l.b16 %v999
        %v1039 = vunpack.c.l.b16 %v1000
        %v1040 = vunpack.c.l.b16 %v1001
        %v1041 = vpack.c.b16 %v1026, %v1025
        %v1042 = vpack.c.b16 %v1028, %v1027
        %v1043 = vpack.c.b16 %v1030, %v1029
        %v1044 = vpack.c.b16 %v1032, %v1031
        %v1045 = vpack.c.b16 %v1034, %v1033
        %v1046 = vpack.c.b16 %v1036, %v1035
        %v1047 = vpack.c.b16 %v1038, %v1037
        %v1048 = vpack.c.b16 %v1040, %v1039
        %1057 = vmatprep.subr.bf16.mxu0 0
        %1058 = vmatpush1.bf16.msra.mxu0 %v1041
        %1059 = vmatprep.subr.bf16.mxu0 0
        %1060 = vmatpush1.bf16.msra.mxu0 %v1042
        %1061 = vmatprep.subr.bf16.mxu0 0
        %1062 = vmatpush1.bf16.msra.mxu0 %v1043
        %1063 = vmatprep.subr.bf16.mxu0 0
        %1064 = vmatpush1.bf16.msra.mxu0 %v1044
        %1065 = vmatprep.subr.bf16.mxu0 0
        %1066 = vmatpush1.bf16.msra.mxu0 %v1045
        %1067 = vmatprep.subr.bf16.mxu0 0
        %1068 = vmatpush1.bf16.msra.mxu0 %v1046
        %1069 = vmatprep.subr.bf16.mxu0 0
        %1070 = vmatpush1.bf16.msra.mxu0 %v1047
        %1071 = vmatprep.subr.bf16.mxu0 0
        %1072 = vmatpush1.bf16.msra.mxu0 %v1048
        %1073 = vmatprep.subr.bf16.mxu0 0
        %1074 = vmatpush1.bf16.msra.mxu0 0
        %1075 = vmatprep.subr.bf16.mxu0 0
        %1076 = vmatpush1.bf16.msra.mxu0 0
        %1077 = vmatprep.subr.bf16.mxu0 0
        %1078 = vmatpush1.bf16.msra.mxu0 0
        %1079 = vmatprep.subr.bf16.mxu0 0
        %1080 = vmatpush1.bf16.msra.mxu0 0
        %1081 = vmatprep.subr.bf16.mxu0 0
        %1082 = vmatpush1.bf16.msra.mxu0 0
        %1083 = vmatprep.subr.bf16.mxu0 0
        %1084 = vmatpush1.bf16.msra.mxu0 0
        %1085 = vmatprep.subr.bf16.mxu0 0
        %1086 = vmatpush1.bf16.msra.mxu0 0
        %1087 = vmatprep.subr.bf16.mxu0 0
        %1088 = vmatpush1.bf16.msra.mxu0 0
        %1089 = vmatprep.mubr.bf16.mxu0 0
        %1090 = vmatmul.mubr.bf16.gmra.mrb[0].mxu0 %v978
        %v1091 = vpop.f32.mrb[0].mxu0
        %v1092 = vadd.f32 %v1007, %v1091
        %v1093 = vpop.f32.mrb[0].mxu0
        %v1094 = vpop.f32.mrb[0].mxu0
        %v1095 = vadd.f32 %v1007, %v1094
        %v1096 = vpop.f32.mrb[0].mxu0
        %1097 = vmatprep.mubr.bf16.mxu0 0
        %1098 = vmatmul.mubr.bf16.gmra.mrb[0].mxu0 %v979
        %v1099 = vpop.f32.mrb[0].mxu0
        %v1100 = vadd.f32 %v1007, %v1099
        %v1101 = vpop.f32.mrb[0].mxu0
        %v1102 = vpop.f32.mrb[0].mxu0
        %v1103 = vadd.f32 %v1007, %v1102
        %v1104 = vpop.f32.mrb[0].mxu0
        %1105 = vmatprep.mubr.bf16.mxu0 0
        %1106 = vmatmul.mubr.bf16.gmra.mrb[0].mxu0 %v980
        %v1107 = vpop.f32.mrb[0].mxu0
        %v1108 = vadd.f32 %v1007, %v1107
        %v1109 = vpop.f32.mrb[0].mxu0
        %v1110 = vpop.f32.mrb[0].mxu0
        %v1111 = vadd.f32 %v1007, %v1110
        %v1112 = vpop.f32.mrb[0].mxu0
        %1113 = vmatprep.mubr.bf16.mxu0 0
        %1114 = vmatmul.mubr.bf16.gmra.mrb[0].mxu0 %v981
        %v1115 = vpop.f32.mrb[0].mxu0
        %v1116 = vadd.f32 %v1007, %v1115
        %v1117 = vpop.f32.mrb[0].mxu0
        %v1118 = vpop.f32.mrb[0].mxu0
        %v1119 = vadd.f32 %v1007, %v1118
        %v1120 = vpop.f32.mrb[0].mxu0
        %1121 = vmatprep.mubr.bf16.mxu0 0
        %1122 = vmatmul.mubr.bf16.gmra.mrb[0].mxu0 %v982
        %v1123 = vpop.f32.mrb[0].mxu0
        %v1124 = vadd.f32 %v1007, %v1123
        %v1125 = vpop.f32.mrb[0].mxu0
        %v1126 = vpop.f32.mrb[0].mxu0
        %v1127 = vadd.f32 %v1007, %v1126
        %v1128 = vpop.f32.mrb[0].mxu0
        %1129 = vmatprep.mubr.bf16.mxu0 0
        %1130 = vmatmul.mubr.bf16.gmra.mrb[0].mxu0 %v983
        %v1131 = vpop.f32.mrb[0].mxu0
        %v1132 = vadd.f32 %v1007, %v1131
        %v1133 = vpop.f32.mrb[0].mxu0
        %v1134 = vpop.f32.mrb[0].mxu0
        %v1135 = vadd.f32 %v1007, %v1134
        %v1136 = vpop.f32.mrb[0].mxu0
        %1137 = vmatprep.mubr.bf16.mxu0 0
        %1138 = vmatmul.mubr.bf16.gmra.mrb[0].mxu0 %v984
        %v1139 = vpop.f32.mrb[0].mxu0
        %v1140 = vadd.f32 %v1007, %v1139
        %v1141 = vpop.f32.mrb[0].mxu0
        %v1142 = vpop.f32.mrb[0].mxu0
        %v1143 = vadd.f32 %v1007, %v1142
        %v1144 = vpop.f32.mrb[0].mxu0
        %1145 = vmatprep.mubr.bf16.mxu0 0
        %1146 = vmatmul.mubr.bf16.gmra.mrb[0].mxu0 %v985
        %v1147 = vpop.f32.mrb[0].mxu0
        %v1148 = vadd.f32 %v1007, %v1147
        %v1149 = vpop.f32.mrb[0].mxu0
        %v1150 = vpop.f32.mrb[0].mxu0
        %v1151 = vadd.f32 %v1007, %v1150
        %v1152 = vpop.f32.mrb[0].mxu0
        %1153 = vdwg.mxu0
        %v1154 = vlaneseq
        %v1155 = vand.u32 %v1154, 127
        %v1156 = vmax.f32 %v1092, 0.0
        %v1157 = vmax.f32 %v1095, 0.0
        %v1158 = vmax.f32 %v1100, 0.0
        %v1159 = vmax.f32 %v1103, 0.0
        %v1160 = vmax.f32 %v1108, 0.0
        %v1161 = vmax.f32 %v1111, 0.0
        %v1162 = vmax.f32 %v1116, 0.0
        %v1163 = vmax.f32 %v1119, 0.0
        %v1164 = vmax.f32 %v1124, 0.0
        %v1165 = vmax.f32 %v1127, 0.0
        %v1166 = vmax.f32 %v1132, 0.0
        %v1167 = vmax.f32 %v1135, 0.0
        %v1168 = vmax.f32 %v1140, 0.0
        %v1169 = vmax.f32 %v1143, 0.0
        %v1170 = vmax.f32 %v1148, 0.0
        %v1171 = vmax.f32 %v1151, 0.0
        %vm1172 = vcmp.ne.f32.partialorder %v1092, %v1092
        %vm1173 = vcmp.ne.f32.partialorder %v1095, %v1095
        %vm1174 = vcmp.ne.f32.partialorder %v1100, %v1100
        %vm1175 = vcmp.ne.f32.partialorder %v1103, %v1103
        %vm1176 = vcmp.ne.f32.partialorder %v1108, %v1108
        %vm1177 = vcmp.ne.f32.partialorder %v1111, %v1111
        %vm1178 = vcmp.ne.f32.partialorder %v1116, %v1116
        %vm1179 = vcmp.ne.f32.partialorder %v1119, %v1119
        %vm1180 = vcmp.ne.f32.partialorder %v1124, %v1124
        %vm1181 = vcmp.ne.f32.partialorder %v1127, %v1127
        %vm1182 = vcmp.ne.f32.partialorder %v1132, %v1132
        %vm1183 = vcmp.ne.f32.partialorder %v1135, %v1135
        %vm1184 = vcmp.ne.f32.partialorder %v1140, %v1140
        %vm1185 = vcmp.ne.f32.partialorder %v1143, %v1143
        %vm1186 = vcmp.ne.f32.partialorder %v1148, %v1148
        %vm1187 = vcmp.ne.f32.partialorder %v1151, %v1151
        %v1188 = vadd.f32 %v1092, 0.0
        %v1189 = vadd.f32 %v1095, 0.0
        %v1190 = vadd.f32 %v1100, 0.0
        %v1191 = vadd.f32 %v1103, 0.0
        %v1192 = vadd.f32 %v1108, 0.0
        %v1193 = vadd.f32 %v1111, 0.0
        %v1194 = vadd.f32 %v1116, 0.0
        %v1195 = vadd.f32 %v1119, 0.0
        %v1196 = vadd.f32 %v1124, 0.0
        %v1197 = vadd.f32 %v1127, 0.0
        %v1198 = vadd.f32 %v1132, 0.0
        %v1199 = vadd.f32 %v1135, 0.0
        %v1200 = vadd.f32 %v1140, 0.0
        %v1201 = vadd.f32 %v1143, 0.0
        %v1202 = vadd.f32 %v1148, 0.0
        %v1203 = vadd.f32 %v1151, 0.0
        %v1204 = vand.u32 2147483647, %v1092
        %v1205 = vand.u32 2147483647, %v1095
        %v1206 = vand.u32 2147483647, %v1100
        %v1207 = vand.u32 2147483647, %v1103
        %v1208 = vand.u32 2147483647, %v1108
        %v1209 = vand.u32 2147483647, %v1111
        %v1210 = vand.u32 2147483647, %v1116
        %v1211 = vand.u32 2147483647, %v1119
        %v1212 = vand.u32 2147483647, %v1124
        %v1213 = vand.u32 2147483647, %v1127
        %v1214 = vand.u32 2147483647, %v1132
        %v1215 = vand.u32 2147483647, %v1135
        %v1216 = vand.u32 2147483647, %v1140
        %v1217 = vand.u32 2147483647, %v1143
        %v1218 = vand.u32 2147483647, %v1148
        %v1219 = vand.u32 2147483647, %v1151
        %v1220 = vsub.f32 0.0, %v1204
        %v1221 = vsub.f32 0.0, %v1205
        %v1222 = vsub.f32 0.0, %v1206
        %v1223 = vsub.f32 0.0, %v1207
        %v1224 = vsub.f32 0.0, %v1208
        %v1225 = vsub.f32 0.0, %v1209
        %v1226 = vsub.f32 0.0, %v1210
        %v1227 = vsub.f32 0.0, %v1211
        %v1228 = vsub.f32 0.0, %v1212
        %v1229 = vsub.f32 0.0, %v1213
        %v1230 = vsub.f32 0.0, %v1214
        %v1231 = vsub.f32 0.0, %v1215
        %v1232 = vsub.f32 0.0, %v1216
        %v1233 = vsub.f32 0.0, %v1217
        %v1234 = vsub.f32 0.0, %v1218
        %v1235 = vsub.f32 0.0, %v1219
        %v1236 = vmul.f32 %v1220, 1.442695
        %v1237 = vpow.pop %v1236
        %v1238 = vmul.f32 %v1221, 1.442695
        %v1239 = vpow.pop %v1238
        %v1240 = vmul.f32 %v1222, 1.442695
        %v1241 = vpow.pop %v1240
        %v1242 = vmul.f32 %v1223, 1.442695
        %v1243 = vpow.pop %v1242
        %v1244 = vmul.f32 %v1224, 1.442695
        %v1245 = vpow.pop %v1244
        %v1246 = vmul.f32 %v1225, 1.442695
        %v1247 = vpow.pop %v1246
        %v1248 = vmul.f32 %v1226, 1.442695
        %v1249 = vpow.pop %v1248
        %v1250 = vmul.f32 %v1227, 1.442695
        %v1251 = vpow.pop %v1250
        %v1252 = vmul.f32 %v1228, 1.442695
        %v1253 = vpow.pop %v1252
        %v1254 = vmul.f32 %v1229, 1.442695
        %v1255 = vpow.pop %v1254
        %v1256 = vmul.f32 %v1230, 1.442695
        %v1257 = vpow.pop %v1256
        %v1258 = vmul.f32 %v1231, 1.442695
        %v1259 = vpow.pop %v1258
        %v1260 = vmul.f32 %v1232, 1.442695
        %v1261 = vpow.pop %v1260
        %v1262 = vmul.f32 %v1233, 1.442695
        %v1263 = vpow.pop %v1262
        %v1264 = vmul.f32 %v1234, 1.442695
        %v1265 = vpow.pop %v1264
        %v1266 = vmul.f32 %v1235, 1.442695
        %v1267 = vpow.pop %v1266
        %v1268 = vadd.f32 %v1237, 1.0
        %v1269 = vlog2.pop %v1268
        %v1270 = vmul.f32 %v1269, 0.6931472
        %v1271 = vmul.f32 -0.5, %v1237
        %v1272 = vadd.f32 %v1271, 1.0
        %v1273 = vmul.f32 %v1272, %v1237
        %v1274 = vand.u32 2147483647, %v1237
        %vm1275 = vcmp.lt.f32.partialorder %v1274, 0.0004427343
        %v1276 = vsel %vm1275, %v1273, %v1270
        %v1277 = vadd.f32 %v1239, 1.0
        %v1278 = vlog2.pop %v1277
        %v1279 = vmul.f32 %v1278, 0.6931472
        %v1280 = vmul.f32 -0.5, %v1239
        %v1281 = vadd.f32 %v1280, 1.0
        %v1282 = vmul.f32 %v1281, %v1239
        %v1283 = vand.u32 2147483647, %v1239
        %vm1284 = vcmp.lt.f32.partialorder %v1283, 0.0004427343
        %v1285 = vsel %vm1284, %v1282, %v1279
        %v1286 = vadd.f32 %v1241, 1.0
        %v1287 = vlog2.pop %v1286
        %v1288 = vmul.f32 %v1287, 0.6931472
        %v1289 = vmul.f32 -0.5, %v1241
        %v1290 = vadd.f32 %v1289, 1.0
        %v1291 = vmul.f32 %v1290, %v1241
        %v1292 = vand.u32 2147483647, %v1241
        %vm1293 = vcmp.lt.f32.partialorder %v1292, 0.0004427343
        %v1294 = vsel %vm1293, %v1291, %v1288
        %v1295 = vadd.f32 %v1243, 1.0
        %v1296 = vlog2.pop %v1295
        %v1297 = vmul.f32 %v1296, 0.6931472
        %v1298 = vmul.f32 -0.5, %v1243
        %v1299 = vadd.f32 %v1298, 1.0
        %v1300 = vmul.f32 %v1299, %v1243
        %v1301 = vand.u32 2147483647, %v1243
        %vm1302 = vcmp.lt.f32.partialorder %v1301, 0.0004427343
        %v1303 = vsel %vm1302, %v1300, %v1297
        %v1304 = vadd.f32 %v1245, 1.0
        %v1305 = vlog2.pop %v1304
        %v1306 = vmul.f32 %v1305, 0.6931472
        %v1307 = vmul.f32 -0.5, %v1245
        %v1308 = vadd.f32 %v1307, 1.0
        %v1309 = vmul.f32 %v1308, %v1245
        %v1310 = vand.u32 2147483647, %v1245
        %vm1311 = vcmp.lt.f32.partialorder %v1310, 0.0004427343
        %v1312 = vsel %vm1311, %v1309, %v1306
        %v1313 = vadd.f32 %v1247, 1.0
        %v1314 = vlog2.pop %v1313
        %v1315 = vmul.f32 %v1314, 0.6931472
        %v1316 = vmul.f32 -0.5, %v1247
        %v1317 = vadd.f32 %v1316, 1.0
        %v1318 = vmul.f32 %v1317, %v1247
        %v1319 = vand.u32 2147483647, %v1247
        %vm1320 = vcmp.lt.f32.partialorder %v1319, 0.0004427343
        %v1321 = vsel %vm1320, %v1318, %v1315
        %v1322 = vadd.f32 %v1249, 1.0
        %v1323 = vlog2.pop %v1322
        %v1324 = vmul.f32 %v1323, 0.6931472
        %v1325 = vmul.f32 -0.5, %v1249
        %v1326 = vadd.f32 %v1325, 1.0
        %v1327 = vmul.f32 %v1326, %v1249
        %v1328 = vand.u32 2147483647, %v1249
        %vm1329 = vcmp.lt.f32.partialorder %v1328, 0.0004427343
        %v1330 = vsel %vm1329, %v1327, %v1324
        %v1331 = vadd.f32 %v1251, 1.0
        %v1332 = vlog2.pop %v1331
        %v1333 = vmul.f32 %v1332, 0.6931472
        %v1334 = vmul.f32 -0.5, %v1251
        %v1335 = vadd.f32 %v1334, 1.0
        %v1336 = vmul.f32 %v1335, %v1251
        %v1337 = vand.u32 2147483647, %v1251
        %vm1338 = vcmp.lt.f32.partialorder %v1337, 0.0004427343
        %v1339 = vsel %vm1338, %v1336, %v1333
        %v1340 = vadd.f32 %v1253, 1.0
        %v1341 = vlog2.pop %v1340
        %v1342 = vmul.f32 %v1341, 0.6931472
        %v1343 = vmul.f32 -0.5, %v1253
        %v1344 = vadd.f32 %v1343, 1.0
        %v1345 = vmul.f32 %v1344, %v1253
        %v1346 = vand.u32 2147483647, %v1253
        %vm1347 = vcmp.lt.f32.partialorder %v1346, 0.0004427343
        %v1348 = vsel %vm1347, %v1345, %v1342
        %v1349 = vadd.f32 %v1255, 1.0
        %v1350 = vlog2.pop %v1349
        %v1351 = vmul.f32 %v1350, 0.6931472
        %v1352 = vmul.f32 -0.5, %v1255
        %v1353 = vadd.f32 %v1352, 1.0
        %v1354 = vmul.f32 %v1353, %v1255
        %v1355 = vand.u32 2147483647, %v1255
        %vm1356 = vcmp.lt.f32.partialorder %v1355, 0.0004427343
        %v1357 = vsel %vm1356, %v1354, %v1351
        %v1358 = vadd.f32 %v1257, 1.0
        %v1359 = vlog2.pop %v1358
        %v1360 = vmul.f32 %v1359, 0.6931472
        %v1361 = vmul.f32 -0.5, %v1257
        %v1362 = vadd.f32 %v1361, 1.0
        %v1363 = vmul.f32 %v1362, %v1257
        %v1364 = vand.u32 2147483647, %v1257
        %vm1365 = vcmp.lt.f32.partialorder %v1364, 0.0004427343
        %v1366 = vsel %vm1365, %v1363, %v1360
        %v1367 = vadd.f32 %v1259, 1.0
        %v1368 = vlog2.pop %v1367
        %v1369 = vmul.f32 %v1368, 0.6931472
        %v1370 = vmul.f32 -0.5, %v1259
        %v1371 = vadd.f32 %v1370, 1.0
        %v1372 = vmul.f32 %v1371, %v1259
        %v1373 = vand.u32 2147483647, %v1259
        %vm1374 = vcmp.lt.f32.partialorder %v1373, 0.0004427343
        %v1375 = vsel %vm1374, %v1372, %v1369
        %v1376 = vadd.f32 %v1261, 1.0
        %v1377 = vlog2.pop %v1376
        %v1378 = vmul.f32 %v1377, 0.6931472
        %v1379 = vmul.f32 -0.5, %v1261
        %v1380 = vadd.f32 %v1379, 1.0
        %v1381 = vmul.f32 %v1380, %v1261
        %v1382 = vand.u32 2147483647, %v1261
        %vm1383 = vcmp.lt.f32.partialorder %v1382, 0.0004427343
        %v1384 = vsel %vm1383, %v1381, %v1378
        %v1385 = vadd.f32 %v1263, 1.0
        %v1386 = vlog2.pop %v1385
        %v1387 = vmul.f32 %v1386, 0.6931472
        %v1388 = vmul.f32 -0.5, %v1263
        %v1389 = vadd.f32 %v1388, 1.0
        %v1390 = vmul.f32 %v1389, %v1263
        %v1391 = vand.u32 2147483647, %v1263
        %vm1392 = vcmp.lt.f32.partialorder %v1391, 0.0004427343
        %v1393 = vsel %vm1392, %v1390, %v1387
        %v1394 = vadd.f32 %v1265, 1.0
        %v1395 = vlog2.pop %v1394
        %v1396 = vmul.f32 %v1395, 0.6931472
        %v1397 = vmul.f32 -0.5, %v1265
        %v1398 = vadd.f32 %v1397, 1.0
        %v1399 = vmul.f32 %v1398, %v1265
        %v1400 = vand.u32 2147483647, %v1265
        %vm1401 = vcmp.lt.f32.partialorder %v1400, 0.0004427343
        %v1402 = vsel %vm1401, %v1399, %v1396
        %v1403 = vadd.f32 %v1267, 1.0
        %v1404 = vlog2.pop %v1403
        %v1405 = vmul.f32 %v1404, 0.6931472
        %v1406 = vmul.f32 -0.5, %v1267
        %v1407 = vadd.f32 %v1406, 1.0
        %v1408 = vmul.f32 %v1407, %v1267
        %v1409 = vand.u32 2147483647, %v1267
        %vm1410 = vcmp.lt.f32.partialorder %v1409, 0.0004427343
        %v1411 = vsel %vm1410, %v1408, %v1405
        %v1412 = vadd.f32 %v1156, %v1276
        %v1413 = vadd.f32 %v1157, %v1285
        %v1414 = vadd.f32 %v1158, %v1294
        %v1415 = vadd.f32 %v1159, %v1303
        %v1416 = vadd.f32 %v1160, %v1312
        %v1417 = vadd.f32 %v1161, %v1321
        %v1418 = vadd.f32 %v1162, %v1330
        %v1419 = vadd.f32 %v1163, %v1339
        %v1420 = vadd.f32 %v1164, %v1348
        %v1421 = vadd.f32 %v1165, %v1357
        %v1422 = vadd.f32 %v1166, %v1366
        %v1423 = vadd.f32 %v1167, %v1375
        %v1424 = vadd.f32 %v1168, %v1384
        %v1425 = vadd.f32 %v1169, %v1393
        %v1426 = vadd.f32 %v1170, %v1402
        %v1427 = vadd.f32 %v1171, %v1411
        %v1428 = vsel %vm1172, %v1188, %v1412
        %v1429 = vsel %vm1173, %v1189, %v1413
        %v1430 = vsel %vm1174, %v1190, %v1414
        %v1431 = vsel %vm1175, %v1191, %v1415
        %v1432 = vsel %vm1176, %v1192, %v1416
        %v1433 = vsel %vm1177, %v1193, %v1417
        %v1434 = vsel %vm1178, %v1194, %v1418
        %v1435 = vsel %vm1179, %v1195, %v1419
        %v1436 = vsel %vm1180, %v1196, %v1420
        %v1437 = vsel %vm1181, %v1197, %v1421
        %v1438 = vsel %vm1182, %v1198, %v1422
        %v1439 = vsel %vm1183, %v1199, %v1423
        %v1440 = vsel %vm1184, %v1200, %v1424
        %v1441 = vsel %vm1185, %v1201, %v1425
        %v1442 = vsel %vm1186, %v1202, %v1426
        %v1443 = vsel %vm1187, %v1203, %v1427
        %v1444 = vadd.f32 %v1428, 1e-07
        %v1445 = vadd.f32 %v1429, 1e-07
        %v1446 = vadd.f32 %v1430, 1e-07
        %v1447 = vadd.f32 %v1431, 1e-07
        %v1448 = vadd.f32 %v1432, 1e-07
        %v1449 = vadd.f32 %v1433, 1e-07
        %v1450 = vadd.f32 %v1434, 1e-07
        %v1451 = vadd.f32 %v1435, 1e-07
        %v1452 = vadd.f32 %v1436, 1e-07
        %v1453 = vadd.f32 %v1437, 1e-07
        %v1454 = vadd.f32 %v1438, 1e-07
        %v1455 = vadd.f32 %v1439, 1e-07
        %v1456 = vadd.f32 %v1440, 1e-07
        %v1457 = vadd.f32 %v1441, 1e-07
        %v1458 = vadd.f32 %v1442, 1e-07
        %v1459 = vadd.f32 %v1443, 1e-07
        %vm1460 = vcmp.lt.s32.totalorder %v1155, 16
        %vm1461 = vcmp.lt.s32.totalorder %v1155, 32
        %vm1462 = vcmp.eq.s32.totalorder %v1155, 32
        %v1463 = vsel %vm1462, %v300, 0.0
        %v1464 = vsel %vm1462, %v303, 0.0
        %v1465 = vsel %vm1462, %v306, 0.0
        %v1466 = vsel %vm1462, %v309, 0.0
        %v1467 = vsel %vm1462, %v312, 0.0
        %v1468 = vsel %vm1462, %v315, 0.0
        %v1469 = vsel %vm1462, %v318, 0.0
        %v1470 = vsel %vm1462, %v321, 0.0
        %v1471 = vsel %vm1462, %v324, 0.0
        %v1472 = vsel %vm1462, %v327, 0.0
        %v1473 = vsel %vm1462, %v330, 0.0
        %v1474 = vsel %vm1462, %v333, 0.0
        %v1475 = vsel %vm1462, %v336, 0.0
        %v1476 = vsel %vm1462, %v339, 0.0
        %v1477 = vsel %vm1462, %v342, 0.0
        %v1478 = vsel %vm1462, %v345, 0.0
        %v1479 = vsel %vm1461, %v1444, %v1463
        %v1480 = vsel %vm1461, %v1445, %v1464
        %v1481 = vsel %vm1461, %v1446, %v1465
        %v1482 = vsel %vm1461, %v1447, %v1466
        %v1483 = vsel %vm1461, %v1448, %v1467
        %v1484 = vsel %vm1461, %v1449, %v1468
        %v1485 = vsel %vm1461, %v1450, %v1469
        %v1486 = vsel %vm1461, %v1451, %v1470
        %v1487 = vsel %vm1461, %v1452, %v1471
        %v1488 = vsel %vm1461, %v1453, %v1472
        %v1489 = vsel %vm1461, %v1454, %v1473
        %v1490 = vsel %vm1461, %v1455, %v1474
        %v1491 = vsel %vm1461, %v1456, %v1475
        %v1492 = vsel %vm1461, %v1457, %v1476
        %v1493 = vsel %vm1461, %v1458, %v1477
        %v1494 = vsel %vm1461, %v1459, %v1478
        %v1495 = vsel %vm1460, %v1092, %v1479
        %v1496 = vsel %vm1460, %v1095, %v1480
        %v1497 = vsel %vm1460, %v1100, %v1481
        %v1498 = vsel %vm1460, %v1103, %v1482
        %v1499 = vsel %vm1460, %v1108, %v1483
        %v1500 = vsel %vm1460, %v1111, %v1484
        %v1501 = vsel %vm1460, %v1116, %v1485
        %v1502 = vsel %vm1460, %v1119, %v1486
        %v1503 = vsel %vm1460, %v1124, %v1487
        %v1504 = vsel %vm1460, %v1127, %v1488
        %v1505 = vsel %vm1460, %v1132, %v1489
        %v1506 = vsel %vm1460, %v1135, %v1490
        %v1507 = vsel %vm1460, %v1140, %v1491
        %v1508 = vsel %vm1460, %v1143, %v1492
        %v1509 = vsel %vm1460, %v1148, %v1493
        %v1510 = vsel %vm1460, %v1151, %v1494
        %1511 = vst [vmem:[%s272] sm:$0xff] %v1495
        %1512 = vst [vmem:[%s272 + $0x8] sm:$0xff] %v1496
        %1513 = vst [vmem:[%s272 + $0x10] sm:$0xff] %v1497
        %1514 = vst [vmem:[%s272 + $0x18] sm:$0xff] %v1498
        %1515 = vst [vmem:[%s272 + $0x20] sm:$0xff] %v1499
        %1516 = vst [vmem:[%s272 + $0x28] sm:$0xff] %v1500
        %1517 = vst [vmem:[%s272 + $0x30] sm:$0xff] %v1501
        %1518 = vst [vmem:[%s272 + $0x38] sm:$0xff] %v1502
        %1519 = vst [vmem:[%s272 + $0x40] sm:$0xff] %v1503
        %1520 = vst [vmem:[%s272 + $0x48] sm:$0xff] %v1504
        %1521 = vst [vmem:[%s272 + $0x50] sm:$0xff] %v1505
        %1522 = vst [vmem:[%s272 + $0x58] sm:$0xff] %v1506
        %1523 = vst [vmem:[%s272 + $0x60] sm:$0xff] %v1507
        %1524 = vst [vmem:[%s272 + $0x68] sm:$0xff] %v1508
        %1525 = vst [vmem:[%s272 + $0x70] sm:$0xff] %v1509
        %1526 = vst [vmem:[%s272 + $0x78] sm:$0xff] %v1510
        %s1527 = sand.u32 %s181, 1
        %s1528 = scalar_lea.sflag [#allocation3], %s1527
        %s1529 = sand.u32 %s181, 1
        %s1530 = smul.addr %s1529, 128
        %s1531 = scalar_lea.vmem [#allocation2], %s1530
        // Predicated region
        $region49: #{tpu_custom_call.1} parent=47 // pred_check
          %p1532 = pneg %p191
        $region50: #{tpu_custom_call.1} parent=47 // pred_check_branch
          %1534 = sbr.rel (%p1532) target = $region52
        $region51: #{tpu_custom_call.1} parent=47 // pred_region
          %s1535 = smul.u32 16, %s21
          %s1537 = ssub.s32 2048, 2048
          %1538 = vsyncadd %s1528, %s1537
          %s1539 = smul.addr %s1535, 128
          %s1540 = scalar_lea.hbm %s7, %s1539
          %s1541 = sshll.u32 %s1531, 4
          %s1542 = int_to_ptr.vmem [resolvable:$true] %s1541
          %1547 = dma.vmem_to_hbm [thread:$0]  %s1542, 2048, %s1540, %s1528, 128, 128, 8
        $region52: #{tpu_custom_call.1} parent=47 // pred_fallthru
          _
      $region48: #{tpu_custom_call.1} parent=5 // pred_fallthru
        _
      %p1548 = scmp.le.s32.totalorder 2, %s16
      // Predicated region
      $region53: #{tpu_custom_call.1} parent=5 // pred_check
        %p1549 = pneg %p1548
      $region54: #{tpu_custom_call.1} parent=5 // pred_check_branch
        %1551 = sbr.rel (%p1549) target = $region56
      $region55: #{tpu_custom_call.1} parent=5 // pred_region
        %s1552 = ssub.s32 %s16, 2
        // Predicated region
        $region57: #{tpu_custom_call.1} parent=55 // pred_check
          %p1553 = pneg %p197
        $region58: #{tpu_custom_call.1} parent=55 // pred_check_branch
          %1555 = sbr.rel (%p1553) target = $region60
        $region59: #{tpu_custom_call.1} parent=55 // pred_region
          %s1556 = sand.u32 %s182, 1
          %s1557 = scalar_lea.sflag [#allocation3], %s1556
          %s1558 = sand.u32 %s182, 1
          %s1559 = smul.addr %s1558, 128
          %s1560 = scalar_lea.vmem [#allocation2], %s1559
          %1561 = dma.done %s1557, 2048
        $region60: #{tpu_custom_call.1} parent=55 // pred_fallthru
          _
      $region56: #{tpu_custom_call.1} parent=5 // pred_fallthru
        _
    $region6: #{tpu_custom_call.1} parent=1 // loop_footer
      %s20 = sadd.s32 1, %s16
    $region7: #{tpu_custom_call.1} parent=1 // loop_footer_branch
      %15 = sbr.rel target = $region3
    $region8: #{tpu_custom_call.1} parent=1 // loop_exit
      _
    %1562 = vsyncpa [#allocation3], 1
    %s1563 = scalar_lea.sflag [#allocation3], 1
    %1564 = vsyncpa %s1563, 1

</llo_original>
